<compile_context>
chip_gen: v7x
topology: tpu7x:2x2x1
jax: 0.10.0
libtpu: 0.0.40
codegen_flags: <defaults>
</compile_context>

<pallas_src>
import jax
import jax.numpy as jnp
from jax.experimental import pallas as pl
from jax.experimental.pallas import tpu as pltpu

BN_EPS = 1e-5
OUT_PAD = 128          # lane-dense padded output width (logits | glob | zeros)
VEC_TABLE_ROWS = 16    # packed small-vector table height (13 used, 8-aligned)

# Row layout of the packed (VEC_TABLE_ROWS, vec_pad) small-vector table.
_VEC_ROW = {
    "gpre": 0, "bpre": 1,
    "g1": 2, "be1": 3,
    "g2": 4, "be2": 5,
    "g3": 6, "be3": 7,
    "gf1": 8, "bef1": 9,
    "gf2": 10, "bef2": 11,
    "bhead": 12,          # [bc1 | bs1], width 2*256
}


def _bn_train(h, gamma, beta):
    """PyTorch BatchNorm1d training mode, single pass (biased var, eps=1e-5)."""
    mu = jnp.mean(h, axis=0, keepdims=True)
    msq = jnp.mean(h * h, axis=0, keepdims=True)
    var = jnp.maximum(msq - mu * mu, 0.0)
    return (h - mu) * jax.lax.rsqrt(var + BN_EPS) * gamma + beta


def _relu(h):
    return jnp.maximum(h, 0.0)


def _round_up(a, m):
    return ((a + m - 1) // m) * m


def _make_kernel(B, N, dims):
    """Fused PointNet forward kernel for static (B, N) and layer widths."""
    pts_dim, c1, c2, c3, f1, f2, head2 = dims

    def kernel(x_ref, vec_ref, w1_ref, w2_ref, w3_ref, wf1_ref, wf2_ref,
               wh1_ref, wh2_ref, out_ref):
        def vec(name, width):
            r = _VEC_ROW[name]
            return vec_ref[r:r + 1, :width]          # static (1, width) slice

        def mm(a, w_ref):
            # bf16 x bf16 MXU matmul, f32 accumulation; activations stay f32
            # everywhere else.
            return jnp.dot(a.astype(jnp.bfloat16), w_ref[...],
                           preferred_element_type=jnp.float32)

        # ---- PointNetfeat: per-point MLP (1x1 convs) + BN + ReLU -------------
        h = _bn_train(x_ref[...], vec("gpre", pts_dim), vec("bpre", pts_dim))
        h = _relu(_bn_train(mm(h, w1_ref), vec("g1", c1), vec("be1", c1)))
        h = _relu(_bn_train(mm(h, w2_ref), vec("g2", c2), vec("be2", c2)))
        h = _bn_train(mm(h, w3_ref), vec("g3", c3), vec("be3", c3))   # no relu

        # torch.max(x, 2): per point-cloud max over its N points.
        f = jnp.max(h.reshape(B, N, c3), axis=1)                      # (B, c3)

        # ---- classifier trunk -----------------------------------------------
        f = _relu(_bn_train(mm(f, wf1_ref), vec("gf1", f1), vec("bef1", f1)))
        feat = _relu(_bn_train(mm(f, wf2_ref), vec("gf2", f2), vec("bef2", f2)))

        # ---- fused heads: [fc_c1|fc_s1] + ReLU, then block-diag [fc_c2,fc_s2]
        hh = _relu(mm(feat, wh1_ref) + vec("bhead", head2))           # (B, 512)
        out_ref[...] = mm(hh, wh2_ref)      # (B, OUT_PAD), lane-dense, unmasked

    return kernel


def init_params(key, pts_dim, x_mult, cls_num):
    """Raw torch-like parameters (f32, weights stored transposed (Cin, Cout))."""
    c1, c2, c3 = int(64 * x_mult), int(128 * x_mult), int(512 * x_mult)
    f1, f2 = int(256 * x_mult), 256
    keys = jax.random.split(key, 16)

    def w(k, shape, scale=0.1):
        return scale * jax.random.normal(k, shape, jnp.float32)

    return {
        "gpre": jnp.ones((1, pts_dim), jnp.float32),
        "bpre": jnp.zeros((1, pts_dim), jnp.float32),
        "w1": w(keys[0], (pts_dim, c1)), "b1": w(keys[1], (1, c1), 0.01),
        "g1": jnp.ones((1, c1), jnp.float32), "be1": jnp.zeros((1, c1), jnp.float32),
        "w2": w(keys[2], (c1, c2)), "b2": w(keys[3], (1, c2), 0.01),
        "g2": jnp.ones((1, c2), jnp.float32), "be2": jnp.zeros((1, c2), jnp.float32),
        "w3": w(keys[4], (c2, c3)), "b3": w(keys[5], (1, c3), 0.01),
        "g3": jnp.ones((1, c3), jnp.float32), "be3": jnp.zeros((1, c3), jnp.float32),
        "wf1": w(keys[6], (c3, f1)), "bf1": w(keys[7], (1, f1), 0.01),
        "gf1": jnp.ones((1, f1), jnp.float32), "bef1": jnp.zeros((1, f1), jnp.float32),
        "wf2": w(keys[8], (f1, f2)), "bf2": w(keys[9], (1, f2), 0.01),
        "gf2": jnp.ones((1, f2), jnp.float32), "bef2": jnp.zeros((1, f2), jnp.float32),
        "wc1": w(keys[10], (f2, 256)), "bc1": w(keys[11], (1, 256), 0.01),
        "wc2": w(keys[12], (256, cls_num)),
        "ws1": w(keys[13], (f2, 256)), "bs1": w(keys[14], (1, 256), 0.01),
        "ws2": w(keys[15], (256, 1)),
    }


def pack_params(p, cls_num):
    """One-time host-side packing: bf16 weights, fused heads, one vector table."""
    pts_dim, c1 = p["w1"].shape
    c2 = p["w2"].shape[1]
    c3 = p["w3"].shape[1]
    f1 = p["wf1"].shape[1]
    f2 = p["wf2"].shape[1]
    hh = p["wc1"].shape[1]                     # 256
    head2 = 2 * hh
    assert cls_num + 1 <= OUT_PAD

    vec_pad = _round_up(max(pts_dim, c1, c2, c3, f1, f2, head2, 128), 128)
    vecs = jnp.zeros((VEC_TABLE_ROWS, vec_pad), jnp.float32)
    for name in ("gpre", "bpre", "g1", "be1", "g2", "be2",
                 "g3", "be3", "gf1", "bef1", "gf2", "bef2"):
        v = p[name].reshape(-1)
        vecs = vecs.at[_VEC_ROW[name], :v.shape[0]].set(v)
    bhead = jnp.concatenate([p["bc1"].reshape(-1), p["bs1"].reshape(-1)])
    vecs = vecs.at[_VEC_ROW["bhead"], :head2].set(bhead)

    # Fused head weights: [fc_c1 | fc_s1] and block-diag [fc_c2, 0; 0, fc_s2],
    # padded to OUT_PAD lanes so the final store is lane-dense & unmasked.
    wh1 = jnp.concatenate([p["wc1"], p["ws1"]], axis=1)            # (f2, head2)
    wh2 = jnp.zeros((head2, OUT_PAD), jnp.float32)
    wh2 = wh2.at[:hh, :cls_num].set(p["wc2"])
    wh2 = wh2.at[hh:, cls_num].set(p["ws2"][:, 0])

    bf16 = lambda a: a.astype(jnp.bfloat16)
    return {
        "vecs": vecs,
        "w1": bf16(p["w1"]), "w2": bf16(p["w2"]), "w3": bf16(p["w3"]),
        "wf1": bf16(p["wf1"]), "wf2": bf16(p["wf2"]),
        "wh1": bf16(wh1), "wh2": bf16(wh2),
    }


def pointnet_forward(x_ncw, packed, cls_num):
    """x_ncw: (B, pts_dim, N) f32 -> (logits (B, cls_num), global_logits (B, 1))."""
    B, C, N = x_ncw.shape
    # NCW -> points-as-rows; tiny tensor, kept host-side (see header comment).
    x_rows = jnp.transpose(x_ncw, (0, 2, 1)).reshape(B * N, C)

    dims = (packed["w1"].shape[0], packed["w1"].shape[1], packed["w2"].shape[1],
            packed["w3"].shape[1], packed["wf1"].shape[1], packed["wf2"].shape[1],
            packed["wh1"].shape[1])
    kernel = _make_kernel(B, N, dims)

    args = (x_rows, packed["vecs"], packed["w1"], packed["w2"], packed["w3"],
            packed["wf1"], packed["wf2"], packed["wh1"], packed["wh2"])
    vmem = pl.BlockSpec(memory_space=pltpu.MemorySpace.VMEM)
    out = pl.pallas_call(
        kernel,
        out_shape=jax.ShapeDtypeStruct((B, OUT_PAD), jnp.float32),
        in_specs=[vmem] * len(args),
        out_specs=vmem,
    )(*args)
    return out[:, :cls_num], out[:, cls_num:cls_num + 1]


def reference_forward(x_ncw, p, cls_num):
    """Pure-JAX reference mirroring the torch forward (unfused heads, with the
    BN-cancelled biases included, same bf16-weight matmul precision)."""
    B, C, N = x_ncw.shape

    def mm(a, w):
        return jnp.dot(a.astype(jnp.bfloat16), w.astype(jnp.bfloat16),
                       preferred_element_type=jnp.float32)

    h = jnp.transpose(x_ncw, (0, 2, 1)).reshape(B * N, C)
    h = _bn_train(h, p["gpre"], p["bpre"])
    h = _relu(_bn_train(mm(h, p["w1"]) + p["b1"], p["g1"], p["be1"]))
    h = _relu(_bn_train(mm(h, p["w2"]) + p["b2"], p["g2"], p["be2"]))
    h = _bn_train(mm(h, p["w3"]) + p["b3"], p["g3"], p["be3"])
    f = jnp.max(h.reshape(B, N, -1), axis=1)
    f = _relu(_bn_train(mm(f, p["wf1"]) + p["bf1"], p["gf1"], p["bef1"]))
    feat = _relu(_bn_train(mm(f, p["wf2"]) + p["bf2"], p["gf2"], p["bef2"]))
    c = _relu(mm(feat, p["wc1"]) + p["bc1"])
    logits = mm(c, p["wc2"])
    s = _relu(mm(feat, p["ws1"]) + p["bs1"])
    glob = mm(s, p["ws2"])
    return logits, glob


if __name__ == "__main__":
    # Small shapes consistent with the module: x = (B, pts_dim, N_points), NCW.
    B, PTS_DIM, N_POINTS = 2, 4, 16
    X_MULT, CLS_NUM = 1, 5

    key = jax.random.PRNGKey(0)
    kx, kp = jax.random.split(key)
    x = jax.random.normal(kx, (B, PTS_DIM, N_POINTS), jnp.float32)

    raw_params = init_params(kp, PTS_DIM, X_MULT, CLS_NUM)
    packed = pack_params(raw_params, CLS_NUM)

    logits, global_logits = pointnet_forward(x, packed, CLS_NUM)
    logits = jax.block_until_ready(logits)
    global_logits = jax.block_until_ready(global_logits)

    # Sanity check against the pure-JAX reference (unfused, biases included).
    ref_logits, ref_glob = reference_forward(x, raw_params, CLS_NUM)
    assert logits.shape == (B, CLS_NUM) and global_logits.shape == (B, 1)
    assert jnp.allclose(logits, ref_logits, atol=5e-2, rtol=5e-2)
    assert jnp.allclose(global_logits, ref_glob, atol=5e-2, rtol=5e-2)

    print("KERNEL_OK")
</pallas_src>

<mosaic_0001>
module attributes {stable_mosaic.version = 11 : i64} {
  func.func @kernel(%arg0: memref<32x4xf32, #tpu.memory_space<vmem>>, %arg1: memref<16x512xf32, #tpu.memory_space<vmem>>, %arg2: memref<4x64xbf16, #tpu.memory_space<vmem>>, %arg3: memref<64x128xbf16, #tpu.memory_space<vmem>>, %arg4: memref<128x512xbf16, #tpu.memory_space<vmem>>, %arg5: memref<512x256xbf16, #tpu.memory_space<vmem>>, %arg6: memref<256x256xbf16, #tpu.memory_space<vmem>>, %arg7: memref<256x512xbf16, #tpu.memory_space<vmem>>, %arg8: memref<512x128xbf16, #tpu.memory_space<vmem>>, %arg9: memref<2x128xf32, #tpu.memory_space<vmem>>) attributes {dimension_semantics = [], scalar_prefetch = 0 : i64, scratch_operands = 0 : i64, tpu.core_type = #tpu.core_type<tc>} {
    %c0 = arith.constant 0 : index
    %c0_0 = arith.constant 0 : index
    %0 = vector.load %arg0[%c0, %c0_0] : memref<32x4xf32, #tpu.memory_space<vmem>>, vector<32x4xf32>
    %c0_1 = arith.constant 0 : index
    %c0_2 = arith.constant 0 : index
    %1 = vector.load %arg1[%c0_1, %c0_2] : memref<16x512xf32, #tpu.memory_space<vmem>>, vector<1x4xf32>
    %c1 = arith.constant 1 : index
    %c0_3 = arith.constant 0 : index
    %2 = vector.load %arg1[%c1, %c0_3] : memref<16x512xf32, #tpu.memory_space<vmem>>, vector<1x4xf32>
    %cst = arith.constant dense<0.000000e+00> : vector<4xf32>
    %3 = vector.multi_reduction <add>, %0, %cst [0] : vector<32x4xf32> to vector<4xf32>
    %4 = vector.shape_cast %3 : vector<4xf32> to vector<1x4xf32>
    %cst_4 = arith.constant 3.200000e+01 : f32
    %5 = vector.broadcast %cst_4 : f32 to vector<1x4xf32>
    %6 = arith.divf %4, %5 : vector<1x4xf32>
    %7 = arith.mulf %0, %0 : vector<32x4xf32>
    %cst_5 = arith.constant dense<0.000000e+00> : vector<4xf32>
    %8 = vector.multi_reduction <add>, %7, %cst_5 [0] : vector<32x4xf32> to vector<4xf32>
    %9 = vector.shape_cast %8 : vector<4xf32> to vector<1x4xf32>
    %cst_6 = arith.constant 3.200000e+01 : f32
    %10 = vector.broadcast %cst_6 : f32 to vector<1x4xf32>
    %11 = arith.divf %9, %10 : vector<1x4xf32>
    %12 = arith.mulf %6, %6 : vector<1x4xf32>
    %13 = arith.subf %11, %12 : vector<1x4xf32>
    %cst_7 = arith.constant 0.000000e+00 : f32
    %14 = vector.broadcast %cst_7 : f32 to vector<1x4xf32>
    %15 = arith.maximumf %13, %14 : vector<1x4xf32>
    %16 = vector.broadcast %6 : vector<1x4xf32> to vector<32x4xf32>
    %17 = arith.subf %0, %16 : vector<32x4xf32>
    %cst_8 = arith.constant 9.99999974E-6 : f32
    %18 = vector.broadcast %cst_8 : f32 to vector<1x4xf32>
    %19 = arith.addf %15, %18 : vector<1x4xf32>
    %20 = math.rsqrt %19 : vector<1x4xf32>
    %21 = vector.broadcast %20 : vector<1x4xf32> to vector<32x4xf32>
    %22 = arith.mulf %17, %21 : vector<32x4xf32>
    %23 = vector.broadcast %1 : vector<1x4xf32> to vector<32x4xf32>
    %24 = arith.mulf %22, %23 : vector<32x4xf32>
    %25 = vector.broadcast %2 : vector<1x4xf32> to vector<32x4xf32>
    %26 = arith.addf %24, %25 : vector<32x4xf32>
    %27 = arith.truncf %26 : vector<32x4xf32> to vector<32x4xbf16>
    %c0_9 = arith.constant 0 : index
    %c0_10 = arith.constant 0 : index
    %28 = vector.load %arg2[%c0_9, %c0_10] : memref<4x64xbf16, #tpu.memory_space<vmem>>, vector<4x64xbf16>
    %cst_11 = arith.constant dense<0.000000e+00> : vector<32x64xf32>
    %29 = tpu.matmul %27, %28, %cst_11 {dimension_numbers = #tpu.dot_dimension_numbers<[1], [0], [0], [1], [0, 0, 1, 1], [], []>} : vector<32x4xbf16>, vector<4x64xbf16>, vector<32x64xf32> -> vector<32x64xf32>
    %c2 = arith.constant 2 : index
    %c0_12 = arith.constant 0 : index
    %30 = vector.load %arg1[%c2, %c0_12] : memref<16x512xf32, #tpu.memory_space<vmem>>, vector<1x64xf32>
    %c3 = arith.constant 3 : index
    %c0_13 = arith.constant 0 : index
    %31 = vector.load %arg1[%c3, %c0_13] : memref<16x512xf32, #tpu.memory_space<vmem>>, vector<1x64xf32>
    %cst_14 = arith.constant dense<0.000000e+00> : vector<64xf32>
    %32 = vector.multi_reduction <add>, %29, %cst_14 [0] : vector<32x64xf32> to vector<64xf32>
    %33 = vector.shape_cast %32 : vector<64xf32> to vector<1x64xf32>
    %cst_15 = arith.constant 3.200000e+01 : f32
    %34 = vector.broadcast %cst_15 : f32 to vector<1x64xf32>
    %35 = arith.divf %33, %34 : vector<1x64xf32>
    %36 = arith.mulf %29, %29 : vector<32x64xf32>
    %cst_16 = arith.constant dense<0.000000e+00> : vector<64xf32>
    %37 = vector.multi_reduction <add>, %36, %cst_16 [0] : vector<32x64xf32> to vector<64xf32>
    %38 = vector.shape_cast %37 : vector<64xf32> to vector<1x64xf32>
    %cst_17 = arith.constant 3.200000e+01 : f32
    %39 = vector.broadcast %cst_17 : f32 to vector<1x64xf32>
    %40 = arith.divf %38, %39 : vector<1x64xf32>
    %41 = arith.mulf %35, %35 : vector<1x64xf32>
    %42 = arith.subf %40, %41 : vector<1x64xf32>
    %cst_18 = arith.constant 0.000000e+00 : f32
    %43 = vector.broadcast %cst_18 : f32 to vector<1x64xf32>
    %44 = arith.maximumf %42, %43 : vector<1x64xf32>
    %45 = vector.broadcast %35 : vector<1x64xf32> to vector<32x64xf32>
    %46 = arith.subf %29, %45 : vector<32x64xf32>
    %cst_19 = arith.constant 9.99999974E-6 : f32
    %47 = vector.broadcast %cst_19 : f32 to vector<1x64xf32>
    %48 = arith.addf %44, %47 : vector<1x64xf32>
    %49 = math.rsqrt %48 : vector<1x64xf32>
    %50 = vector.broadcast %49 : vector<1x64xf32> to vector<32x64xf32>
    %51 = arith.mulf %46, %50 : vector<32x64xf32>
    %52 = vector.broadcast %30 : vector<1x64xf32> to vector<32x64xf32>
    %53 = arith.mulf %51, %52 : vector<32x64xf32>
    %54 = vector.broadcast %31 : vector<1x64xf32> to vector<32x64xf32>
    %55 = arith.addf %53, %54 : vector<32x64xf32>
    %cst_20 = arith.constant 0.000000e+00 : f32
    %56 = vector.broadcast %cst_20 : f32 to vector<32x64xf32>
    %57 = arith.maximumf %55, %56 : vector<32x64xf32>
    %58 = arith.truncf %57 : vector<32x64xf32> to vector<32x64xbf16>
    %c0_21 = arith.constant 0 : index
    %c0_22 = arith.constant 0 : index
    %59 = vector.load %arg3[%c0_21, %c0_22] : memref<64x128xbf16, #tpu.memory_space<vmem>>, vector<64x128xbf16>
    %cst_23 = arith.constant dense<0.000000e+00> : vector<32x128xf32>
    %60 = tpu.matmul %58, %59, %cst_23 {dimension_numbers = #tpu.dot_dimension_numbers<[1], [0], [0], [1], [0, 0, 1, 1], [], []>} : vector<32x64xbf16>, vector<64x128xbf16>, vector<32x128xf32> -> vector<32x128xf32>
    %c4 = arith.constant 4 : index
    %c0_24 = arith.constant 0 : index
    %61 = vector.load %arg1[%c4, %c0_24] : memref<16x512xf32, #tpu.memory_space<vmem>>, vector<1x128xf32>
    %c5 = arith.constant 5 : index
    %c0_25 = arith.constant 0 : index
    %62 = vector.load %arg1[%c5, %c0_25] : memref<16x512xf32, #tpu.memory_space<vmem>>, vector<1x128xf32>
    %cst_26 = arith.constant dense<0.000000e+00> : vector<128xf32>
    %63 = vector.multi_reduction <add>, %60, %cst_26 [0] : vector<32x128xf32> to vector<128xf32>
    %64 = vector.shape_cast %63 : vector<128xf32> to vector<1x128xf32>
    %cst_27 = arith.constant 3.200000e+01 : f32
    %65 = vector.broadcast %cst_27 : f32 to vector<1x128xf32>
    %66 = arith.divf %64, %65 : vector<1x128xf32>
    %67 = arith.mulf %60, %60 : vector<32x128xf32>
    %cst_28 = arith.constant dense<0.000000e+00> : vector<128xf32>
    %68 = vector.multi_reduction <add>, %67, %cst_28 [0] : vector<32x128xf32> to vector<128xf32>
    %69 = vector.shape_cast %68 : vector<128xf32> to vector<1x128xf32>
    %cst_29 = arith.constant 3.200000e+01 : f32
    %70 = vector.broadcast %cst_29 : f32 to vector<1x128xf32>
    %71 = arith.divf %69, %70 : vector<1x128xf32>
    %72 = arith.mulf %66, %66 : vector<1x128xf32>
    %73 = arith.subf %71, %72 : vector<1x128xf32>
    %cst_30 = arith.constant 0.000000e+00 : f32
    %74 = vector.broadcast %cst_30 : f32 to vector<1x128xf32>
    %75 = arith.maximumf %73, %74 : vector<1x128xf32>
    %76 = vector.broadcast %66 : vector<1x128xf32> to vector<32x128xf32>
    %77 = arith.subf %60, %76 : vector<32x128xf32>
    %cst_31 = arith.constant 9.99999974E-6 : f32
    %78 = vector.broadcast %cst_31 : f32 to vector<1x128xf32>
    %79 = arith.addf %75, %78 : vector<1x128xf32>
    %80 = math.rsqrt %79 : vector<1x128xf32>
    %81 = vector.broadcast %80 : vector<1x128xf32> to vector<32x128xf32>
    %82 = arith.mulf %77, %81 : vector<32x128xf32>
    %83 = vector.broadcast %61 : vector<1x128xf32> to vector<32x128xf32>
    %84 = arith.mulf %82, %83 : vector<32x128xf32>
    %85 = vector.broadcast %62 : vector<1x128xf32> to vector<32x128xf32>
    %86 = arith.addf %84, %85 : vector<32x128xf32>
    %cst_32 = arith.constant 0.000000e+00 : f32
    %87 = vector.broadcast %cst_32 : f32 to vector<32x128xf32>
    %88 = arith.maximumf %86, %87 : vector<32x128xf32>
    %89 = arith.truncf %88 : vector<32x128xf32> to vector<32x128xbf16>
    %c0_33 = arith.constant 0 : index
    %c0_34 = arith.constant 0 : index
    %90 = vector.load %arg4[%c0_33, %c0_34] : memref<128x512xbf16, #tpu.memory_space<vmem>>, vector<128x512xbf16>
    %cst_35 = arith.constant dense<0.000000e+00> : vector<32x512xf32>
    %91 = tpu.matmul %89, %90, %cst_35 {dimension_numbers = #tpu.dot_dimension_numbers<[1], [0], [0], [1], [0, 0, 1, 1], [], []>} : vector<32x128xbf16>, vector<128x512xbf16>, vector<32x512xf32> -> vector<32x512xf32>
    %c6 = arith.constant 6 : index
    %c0_36 = arith.constant 0 : index
    %92 = vector.load %arg1[%c6, %c0_36] : memref<16x512xf32, #tpu.memory_space<vmem>>, vector<1x512xf32>
    %c7 = arith.constant 7 : index
    %c0_37 = arith.constant 0 : index
    %93 = vector.load %arg1[%c7, %c0_37] : memref<16x512xf32, #tpu.memory_space<vmem>>, vector<1x512xf32>
    %cst_38 = arith.constant dense<0.000000e+00> : vector<512xf32>
    %94 = vector.multi_reduction <add>, %91, %cst_38 [0] : vector<32x512xf32> to vector<512xf32>
    %95 = vector.shape_cast %94 : vector<512xf32> to vector<1x512xf32>
    %cst_39 = arith.constant 3.200000e+01 : f32
    %96 = vector.broadcast %cst_39 : f32 to vector<1x512xf32>
    %97 = arith.divf %95, %96 : vector<1x512xf32>
    %98 = arith.mulf %91, %91 : vector<32x512xf32>
    %cst_40 = arith.constant dense<0.000000e+00> : vector<512xf32>
    %99 = vector.multi_reduction <add>, %98, %cst_40 [0] : vector<32x512xf32> to vector<512xf32>
    %100 = vector.shape_cast %99 : vector<512xf32> to vector<1x512xf32>
    %cst_41 = arith.constant 3.200000e+01 : f32
    %101 = vector.broadcast %cst_41 : f32 to vector<1x512xf32>
    %102 = arith.divf %100, %101 : vector<1x512xf32>
    %103 = arith.mulf %97, %97 : vector<1x512xf32>
    %104 = arith.subf %102, %103 : vector<1x512xf32>
    %cst_42 = arith.constant 0.000000e+00 : f32
    %105 = vector.broadcast %cst_42 : f32 to vector<1x512xf32>
    %106 = arith.maximumf %104, %105 : vector<1x512xf32>
    %107 = vector.broadcast %97 : vector<1x512xf32> to vector<32x512xf32>
    %108 = arith.subf %91, %107 : vector<32x512xf32>
    %cst_43 = arith.constant 9.99999974E-6 : f32
    %109 = vector.broadcast %cst_43 : f32 to vector<1x512xf32>
    %110 = arith.addf %106, %109 : vector<1x512xf32>
    %111 = math.rsqrt %110 : vector<1x512xf32>
    %112 = vector.broadcast %111 : vector<1x512xf32> to vector<32x512xf32>
    %113 = arith.mulf %108, %112 : vector<32x512xf32>
    %114 = vector.broadcast %92 : vector<1x512xf32> to vector<32x512xf32>
    %115 = arith.mulf %113, %114 : vector<32x512xf32>
    %116 = vector.broadcast %93 : vector<1x512xf32> to vector<32x512xf32>
    %117 = arith.addf %115, %116 : vector<32x512xf32>
    %118 = vector.shape_cast %117 : vector<32x512xf32> to vector<2x16x512xf32>
    %cst_44 = arith.constant dense<0xFF800000> : vector<2x512xf32>
    %119 = vector.multi_reduction <maximumf>, %118, %cst_44 [1] : vector<2x16x512xf32> to vector<2x512xf32>
    %120 = arith.truncf %119 : vector<2x512xf32> to vector<2x512xbf16>
    %c0_45 = arith.constant 0 : index
    %c0_46 = arith.constant 0 : index
    %121 = vector.load %arg5[%c0_45, %c0_46] : memref<512x256xbf16, #tpu.memory_space<vmem>>, vector<512x256xbf16>
    %cst_47 = arith.constant dense<0.000000e+00> : vector<2x256xf32>
    %122 = tpu.matmul %120, %121, %cst_47 {dimension_numbers = #tpu.dot_dimension_numbers<[1], [0], [0], [1], [0, 0, 1, 1], [], []>} : vector<2x512xbf16>, vector<512x256xbf16>, vector<2x256xf32> -> vector<2x256xf32>
    %c8 = arith.constant 8 : index
    %c0_48 = arith.constant 0 : index
    %123 = vector.load %arg1[%c8, %c0_48] : memref<16x512xf32, #tpu.memory_space<vmem>>, vector<1x256xf32>
    %c9 = arith.constant 9 : index
    %c0_49 = arith.constant 0 : index
    %124 = vector.load %arg1[%c9, %c0_49] : memref<16x512xf32, #tpu.memory_space<vmem>>, vector<1x256xf32>
    %cst_50 = arith.constant dense<0.000000e+00> : vector<256xf32>
    %125 = vector.multi_reduction <add>, %122, %cst_50 [0] : vector<2x256xf32> to vector<256xf32>
    %126 = vector.shape_cast %125 : vector<256xf32> to vector<1x256xf32>
    %cst_51 = arith.constant 2.000000e+00 : f32
    %127 = vector.broadcast %cst_51 : f32 to vector<1x256xf32>
    %128 = arith.divf %126, %127 : vector<1x256xf32>
    %129 = arith.mulf %122, %122 : vector<2x256xf32>
    %cst_52 = arith.constant dense<0.000000e+00> : vector<256xf32>
    %130 = vector.multi_reduction <add>, %129, %cst_52 [0] : vector<2x256xf32> to vector<256xf32>
    %131 = vector.shape_cast %130 : vector<256xf32> to vector<1x256xf32>
    %cst_53 = arith.constant 2.000000e+00 : f32
    %132 = vector.broadcast %cst_53 : f32 to vector<1x256xf32>
    %133 = arith.divf %131, %132 : vector<1x256xf32>
    %134 = arith.mulf %128, %128 : vector<1x256xf32>
    %135 = arith.subf %133, %134 : vector<1x256xf32>
    %cst_54 = arith.constant 0.000000e+00 : f32
    %136 = vector.broadcast %cst_54 : f32 to vector<1x256xf32>
    %137 = arith.maximumf %135, %136 : vector<1x256xf32>
    %138 = vector.broadcast %128 : vector<1x256xf32> to vector<2x256xf32>
    %139 = arith.subf %122, %138 : vector<2x256xf32>
    %cst_55 = arith.constant 9.99999974E-6 : f32
    %140 = vector.broadcast %cst_55 : f32 to vector<1x256xf32>
    %141 = arith.addf %137, %140 : vector<1x256xf32>
    %142 = math.rsqrt %141 : vector<1x256xf32>
    %143 = vector.broadcast %142 : vector<1x256xf32> to vector<2x256xf32>
    %144 = arith.mulf %139, %143 : vector<2x256xf32>
    %145 = vector.broadcast %123 : vector<1x256xf32> to vector<2x256xf32>
    %146 = arith.mulf %144, %145 : vector<2x256xf32>
    %147 = vector.broadcast %124 : vector<1x256xf32> to vector<2x256xf32>
    %148 = arith.addf %146, %147 : vector<2x256xf32>
    %cst_56 = arith.constant 0.000000e+00 : f32
    %149 = vector.broadcast %cst_56 : f32 to vector<2x256xf32>
    %150 = arith.maximumf %148, %149 : vector<2x256xf32>
    %151 = arith.truncf %150 : vector<2x256xf32> to vector<2x256xbf16>
    %c0_57 = arith.constant 0 : index
    %c0_58 = arith.constant 0 : index
    %152 = vector.load %arg6[%c0_57, %c0_58] : memref<256x256xbf16, #tpu.memory_space<vmem>>, vector<256x256xbf16>
    %cst_59 = arith.constant dense<0.000000e+00> : vector<2x256xf32>
    %153 = tpu.matmul %151, %152, %cst_59 {dimension_numbers = #tpu.dot_dimension_numbers<[1], [0], [0], [1], [0, 0, 1, 1], [], []>} : vector<2x256xbf16>, vector<256x256xbf16>, vector<2x256xf32> -> vector<2x256xf32>
    %c10 = arith.constant 10 : index
    %c0_60 = arith.constant 0 : index
    %154 = vector.load %arg1[%c10, %c0_60] : memref<16x512xf32, #tpu.memory_space<vmem>>, vector<1x256xf32>
    %c11 = arith.constant 11 : index
    %c0_61 = arith.constant 0 : index
    %155 = vector.load %arg1[%c11, %c0_61] : memref<16x512xf32, #tpu.memory_space<vmem>>, vector<1x256xf32>
    %cst_62 = arith.constant dense<0.000000e+00> : vector<256xf32>
    %156 = vector.multi_reduction <add>, %153, %cst_62 [0] : vector<2x256xf32> to vector<256xf32>
    %157 = vector.shape_cast %156 : vector<256xf32> to vector<1x256xf32>
    %cst_63 = arith.constant 2.000000e+00 : f32
    %158 = vector.broadcast %cst_63 : f32 to vector<1x256xf32>
    %159 = arith.divf %157, %158 : vector<1x256xf32>
    %160 = arith.mulf %153, %153 : vector<2x256xf32>
    %cst_64 = arith.constant dense<0.000000e+00> : vector<256xf32>
    %161 = vector.multi_reduction <add>, %160, %cst_64 [0] : vector<2x256xf32> to vector<256xf32>
    %162 = vector.shape_cast %161 : vector<256xf32> to vector<1x256xf32>
    %cst_65 = arith.constant 2.000000e+00 : f32
    %163 = vector.broadcast %cst_65 : f32 to vector<1x256xf32>
    %164 = arith.divf %162, %163 : vector<1x256xf32>
    %165 = arith.mulf %159, %159 : vector<1x256xf32>
    %166 = arith.subf %164, %165 : vector<1x256xf32>
    %cst_66 = arith.constant 0.000000e+00 : f32
    %167 = vector.broadcast %cst_66 : f32 to vector<1x256xf32>
    %168 = arith.maximumf %166, %167 : vector<1x256xf32>
    %169 = vector.broadcast %159 : vector<1x256xf32> to vector<2x256xf32>
    %170 = arith.subf %153, %169 : vector<2x256xf32>
    %cst_67 = arith.constant 9.99999974E-6 : f32
    %171 = vector.broadcast %cst_67 : f32 to vector<1x256xf32>
    %172 = arith.addf %168, %171 : vector<1x256xf32>
    %173 = math.rsqrt %172 : vector<1x256xf32>
    %174 = vector.broadcast %173 : vector<1x256xf32> to vector<2x256xf32>
    %175 = arith.mulf %170, %174 : vector<2x256xf32>
    %176 = vector.broadcast %154 : vector<1x256xf32> to vector<2x256xf32>
    %177 = arith.mulf %175, %176 : vector<2x256xf32>
    %178 = vector.broadcast %155 : vector<1x256xf32> to vector<2x256xf32>
    %179 = arith.addf %177, %178 : vector<2x256xf32>
    %cst_68 = arith.constant 0.000000e+00 : f32
    %180 = vector.broadcast %cst_68 : f32 to vector<2x256xf32>
    %181 = arith.maximumf %179, %180 : vector<2x256xf32>
    %182 = arith.truncf %181 : vector<2x256xf32> to vector<2x256xbf16>
    %c0_69 = arith.constant 0 : index
    %c0_70 = arith.constant 0 : index
    %183 = vector.load %arg7[%c0_69, %c0_70] : memref<256x512xbf16, #tpu.memory_space<vmem>>, vector<256x512xbf16>
    %cst_71 = arith.constant dense<0.000000e+00> : vector<2x512xf32>
    %184 = tpu.matmul %182, %183, %cst_71 {dimension_numbers = #tpu.dot_dimension_numbers<[1], [0], [0], [1], [0, 0, 1, 1], [], []>} : vector<2x256xbf16>, vector<256x512xbf16>, vector<2x512xf32> -> vector<2x512xf32>
    %c12 = arith.constant 12 : index
    %c0_72 = arith.constant 0 : index
    %185 = vector.load %arg1[%c12, %c0_72] : memref<16x512xf32, #tpu.memory_space<vmem>>, vector<1x512xf32>
    %186 = vector.broadcast %185 : vector<1x512xf32> to vector<2x512xf32>
    %187 = arith.addf %184, %186 : vector<2x512xf32>
    %cst_73 = arith.constant 0.000000e+00 : f32
    %188 = vector.broadcast %cst_73 : f32 to vector<2x512xf32>
    %189 = arith.maximumf %187, %188 : vector<2x512xf32>
    %190 = arith.truncf %189 : vector<2x512xf32> to vector<2x512xbf16>
    %c0_74 = arith.constant 0 : index
    %c0_75 = arith.constant 0 : index
    %191 = vector.load %arg8[%c0_74, %c0_75] : memref<512x128xbf16, #tpu.memory_space<vmem>>, vector<512x128xbf16>
    %cst_76 = arith.constant dense<0.000000e+00> : vector<2x128xf32>
    %192 = tpu.matmul %190, %191, %cst_76 {dimension_numbers = #tpu.dot_dimension_numbers<[1], [0], [0], [1], [0, 0, 1, 1], [], []>} : vector<2x512xbf16>, vector<512x128xbf16>, vector<2x128xf32> -> vector<2x128xf32>
    %c0_77 = arith.constant 0 : index
    %c0_78 = arith.constant 0 : index
    %193 = vector.load %arg9[%c0_77, %c0_78] : memref<2x128xf32, #tpu.memory_space<vmem>>, vector<2x128xf32>
    tpu.vector_store %arg9[%c0_77, %c0_78], %192 {strides = array<i32>} : memref<2x128xf32, #tpu.memory_space<vmem>>, vector<2x128xf32>,
    return
  }
}

</mosaic_0001>

<llo_original>
// kernel: tpu_custom_call.1
$region0: #{tpu_custom_call.1}
  #allocation0 [shape = 'u32[]', space=smem, size = 0x4, offset = 0x4, fixed_abs, tag = 'smem constant byte address 0x4 - core index']
  #allocation1 [shape = 'u32[144,128]{1,0:T(1,128)}', space=vmem, size = 0x12000, scoped, tag = 'internal scratch']
  %s0 = inlined_call_operand.vmem [shape: f32[32,4], index: 0, kind: input, shape index: {}]
  %s1 = inlined_call_operand.hbm [shape: f32[16,512], index: 1, kind: input, shape index: {}]
  %s2 = inlined_call_operand.vmem [shape: bf16[4,64], index: 2, kind: input, shape index: {}]
  %s3 = inlined_call_operand.vmem [shape: bf16[64,128], index: 3, kind: input, shape index: {}]
  %s4 = inlined_call_operand.hbm [shape: bf16[128,512], index: 4, kind: input, shape index: {}]
  %s5 = inlined_call_operand.hbm [shape: bf16[512,256], index: 5, kind: input, shape index: {}]
  %s6 = inlined_call_operand.hbm [shape: bf16[256,256], index: 6, kind: input, shape index: {}]
  %s7 = inlined_call_operand.hbm [shape: bf16[256,512], index: 7, kind: input, shape index: {}]
  %s8 = inlined_call_operand.hbm [shape: bf16[512,128], index: 8, kind: input, shape index: {}]
  %s9 = inlined_call_operand.hbm [shape: f32[2,128], index: 9, kind: output, shape index: {}]
  %s10 = sld [smem:[#allocation0]]
  $region70: #{tpu_custom_call.1} parent=0
    _
  %s12 = ssub.s32 1, %s10
  %s13 = scalar_select 0, %s12, %s10
  $region1: #{tpu_custom_call.1} parent=0
    #allocation2 [shape = 'u8[32768]{0}', space=vmem, size = 0x8000, scoped, tag = 'input window, operand 1, single buffered']
    #allocation3 [shape = 's32[1]{0}', space=sflag, size = 0x4, scoped, tag = 'scoped memory for tpu_custom_call.1']
    #allocation4 [shape = 's32[1]{0}', space=sflag, size = 0x4, scoped, tag = 'scoped memory for tpu_custom_call.1']
    #allocation5 [shape = 'u8[131072]{0}', space=vmem, size = 0x20000, scoped, tag = 'input window, operand 4, single buffered']
    #allocation6 [shape = 's32[1]{0}', space=sflag, size = 0x4, scoped, tag = 'scoped memory for tpu_custom_call.1']
    #allocation7 [shape = 'u8[262144]{0}', space=vmem, size = 0x40000, scoped, tag = 'input window, operand 5, single buffered']
    #allocation8 [shape = 'u8[131072]{0}', space=vmem, size = 0x20000, scoped, tag = 'input window, operand 6, single buffered']
    #allocation9 [shape = 's32[1]{0}', space=sflag, size = 0x4, scoped, tag = 'scoped memory for tpu_custom_call.1']
    #allocation10 [shape = 'u8[262144]{0}', space=vmem, size = 0x40000, scoped, tag = 'input window, operand 7, single buffered']
    #allocation11 [shape = 'u8[131072]{0}', space=vmem, size = 0x20000, scoped, tag = 'input window, operand 8, single buffered']
    #allocation12 [shape = 's32[1]{0}', space=sflag, size = 0x4, scoped, tag = 'scoped memory for tpu_custom_call.1']
    #allocation13 [shape = 'u8[1024]{0}', space=vmem, size = 0x400, scoped, tag = 'output window, operand 0, single buffered']
    %14 = vsyncpa [#allocation3], 0
    %15 = vsyncpa [#allocation6], 0
    %16 = vsyncpa [#allocation9], 0
    %17 = vsyncpa [#allocation12], 0
    %18 = vsyncpa [#allocation4], 0
    // Predicated region
    $region2: #{tpu_custom_call.1} parent=1 // pred_check
      _
    $region3: #{tpu_custom_call.1} parent=1 // pred_check_branch
      %20 = sbr.rel (0) target = $region5
    $region4: #{tpu_custom_call.1} parent=1 // pred_region
      _
    $region5: #{tpu_custom_call.1} parent=1 // pred_fallthru
      _
    // Predicated region
    $region6: #{tpu_custom_call.1} parent=1 // pred_check
      _
    $region7: #{tpu_custom_call.1} parent=1 // pred_check_branch
      %22 = sbr.rel (0) target = $region9
    $region8: #{tpu_custom_call.1} parent=1 // pred_region
      %s24 = ssub.s32 1024, 1024
      %25 = vsyncadd [#allocation3], %s24
      %s26 = sshll.u32 [#allocation2], 4
      %s27 = int_to_ptr.vmem [resolvable:$true] %s26
      %32 = dma.hbm_to_vmem [thread:$0]  %s1, 1024, %s27, [#allocation3], 512, 512, 32
    $region9: #{tpu_custom_call.1} parent=1 // pred_fallthru
      _
    // Predicated region
    $region10: #{tpu_custom_call.1} parent=1 // pred_check
      _
    $region11: #{tpu_custom_call.1} parent=1 // pred_check_branch
      %34 = sbr.rel (0) target = $region13
    $region12: #{tpu_custom_call.1} parent=1 // pred_region
      _
    $region13: #{tpu_custom_call.1} parent=1 // pred_fallthru
      _
    // Predicated region
    $region14: #{tpu_custom_call.1} parent=1 // pred_check
      _
    $region15: #{tpu_custom_call.1} parent=1 // pred_check_branch
      %36 = sbr.rel (0) target = $region17
    $region16: #{tpu_custom_call.1} parent=1 // pred_region
      _
    $region17: #{tpu_custom_call.1} parent=1 // pred_fallthru
      _
    // Predicated region
    $region18: #{tpu_custom_call.1} parent=1 // pred_check
      _
    $region19: #{tpu_custom_call.1} parent=1 // pred_check_branch
      %38 = sbr.rel (0) target = $region21
    $region20: #{tpu_custom_call.1} parent=1 // pred_region
      %s40 = ssub.s32 4096, 4096
      %41 = vsyncadd [#allocation6], %s40
      %s42 = sshll.u32 [#allocation5], 4
      %s43 = int_to_ptr.vmem [resolvable:$true] %s42
      %48 = dma.hbm_to_vmem [thread:$0]  %s4, 4096, %s43, [#allocation6], 256, 256, 16
    $region21: #{tpu_custom_call.1} parent=1 // pred_fallthru
      _
    // Predicated region
    $region22: #{tpu_custom_call.1} parent=1 // pred_check
      _
    $region23: #{tpu_custom_call.1} parent=1 // pred_check_branch
      %50 = sbr.rel (0) target = $region25
    $region24: #{tpu_custom_call.1} parent=1 // pred_region
      %s52 = ssub.s32 8192, 8192
      %53 = vsyncadd [#allocation6], %s52
      %s54 = sshll.u32 [#allocation7], 4
      %s55 = int_to_ptr.vmem [resolvable:$true] %s54
      %60 = dma.hbm_to_vmem [thread:$0]  %s5, 8192, %s55, [#allocation6], 128, 128, 8
    $region25: #{tpu_custom_call.1} parent=1 // pred_fallthru
      _
    // Predicated region
    $region26: #{tpu_custom_call.1} parent=1 // pred_check
      _
    $region27: #{tpu_custom_call.1} parent=1 // pred_check_branch
      %62 = sbr.rel (0) target = $region29
    $region28: #{tpu_custom_call.1} parent=1 // pred_region
      %s64 = ssub.s32 4096, 4096
      %65 = vsyncadd [#allocation9], %s64
      %s66 = sshll.u32 [#allocation8], 4
      %s67 = int_to_ptr.vmem [resolvable:$true] %s66
      %72 = dma.hbm_to_vmem [thread:$0]  %s6, 4096, %s67, [#allocation9], 128, 128, 8
    $region29: #{tpu_custom_call.1} parent=1 // pred_fallthru
      _
    // Predicated region
    $region30: #{tpu_custom_call.1} parent=1 // pred_check
      _
    $region31: #{tpu_custom_call.1} parent=1 // pred_check_branch
      %74 = sbr.rel (0) target = $region33
    $region32: #{tpu_custom_call.1} parent=1 // pred_region
      %s76 = ssub.s32 8192, 8192
      %77 = vsyncadd [#allocation9], %s76
      %s78 = sshll.u32 [#allocation10], 4
      %s79 = int_to_ptr.vmem [resolvable:$true] %s78
      %84 = dma.hbm_to_vmem [thread:$0]  %s7, 8192, %s79, [#allocation9], 256, 256, 16
    $region33: #{tpu_custom_call.1} parent=1 // pred_fallthru
      _
    // Predicated region
    $region34: #{tpu_custom_call.1} parent=1 // pred_check
      _
    $region35: #{tpu_custom_call.1} parent=1 // pred_check_branch
      %86 = sbr.rel (0) target = $region37
    $region36: #{tpu_custom_call.1} parent=1 // pred_region
      %s88 = ssub.s32 4096, 4096
      %89 = vsyncadd [#allocation12], %s88
      %s90 = sshll.u32 [#allocation11], 4
      %s91 = int_to_ptr.vmem [resolvable:$true] %s90
      %96 = dma.hbm_to_vmem [thread:$0]  %s8, 4096, %s91, [#allocation12], 64, 64, 4
    $region37: #{tpu_custom_call.1} parent=1 // pred_fallthru
      _
    // Predicated region
    $region38: #{tpu_custom_call.1} parent=1 // pred_check
      _
    $region39: #{tpu_custom_call.1} parent=1 // pred_check_branch
      %98 = sbr.rel (0) target = $region41
    $region40: #{tpu_custom_call.1} parent=1 // pred_region
      %99 = dma.done [#allocation3], 1024
    $region41: #{tpu_custom_call.1} parent=1 // pred_fallthru
      _
    // Predicated region
    $region42: #{tpu_custom_call.1} parent=1 // pred_check
      _
    $region43: #{tpu_custom_call.1} parent=1 // pred_check_branch
      %101 = sbr.rel (0) target = $region45
    $region44: #{tpu_custom_call.1} parent=1 // pred_region
      %102 = dma.done [#allocation6], 4096
    $region45: #{tpu_custom_call.1} parent=1 // pred_fallthru
      _
    // Predicated region
    $region46: #{tpu_custom_call.1} parent=1 // pred_check
      _
    $region47: #{tpu_custom_call.1} parent=1 // pred_check_branch
      %104 = sbr.rel (0) target = $region49
    $region48: #{tpu_custom_call.1} parent=1 // pred_region
      %105 = dma.done [#allocation6], 8192
    $region49: #{tpu_custom_call.1} parent=1 // pred_fallthru
      _
    // Predicated region
    $region50: #{tpu_custom_call.1} parent=1 // pred_check
      _
    $region51: #{tpu_custom_call.1} parent=1 // pred_check_branch
      %107 = sbr.rel (0) target = $region53
    $region52: #{tpu_custom_call.1} parent=1 // pred_region
      %108 = dma.done [#allocation9], 4096
    $region53: #{tpu_custom_call.1} parent=1 // pred_fallthru
      _
    // Predicated region
    $region54: #{tpu_custom_call.1} parent=1 // pred_check
      _
    $region55: #{tpu_custom_call.1} parent=1 // pred_check_branch
      %110 = sbr.rel (0) target = $region57
    $region56: #{tpu_custom_call.1} parent=1 // pred_region
      %111 = dma.done [#allocation9], 8192
    $region57: #{tpu_custom_call.1} parent=1 // pred_fallthru
      _
    // Predicated region
    $region58: #{tpu_custom_call.1} parent=1 // pred_check
      _
    $region59: #{tpu_custom_call.1} parent=1 // pred_check_branch
      %113 = sbr.rel (0) target = $region61
    $region60: #{tpu_custom_call.1} parent=1 // pred_region
      %114 = dma.done [#allocation12], 4096
    $region61: #{tpu_custom_call.1} parent=1 // pred_fallthru
      _
    %v116 = vld [vmem:[%s0] sm:$0xff]
    %v117 = vld [vmem:[%s0 + $0x8] sm:$0xff]
    %v118 = vld [vmem:[%s0 + $0x10] sm:$0xff]
    %v119 = vld [vmem:[%s0 + $0x18] sm:$0xff]
    %v120 = vld [vmem:[#allocation2] ss:$0 sm:$0xff]
    %v121 = vld [vmem:[#allocation2 + $0x1] ss:$0 sm:$0xff]
    %vm122 = vcmask 31744
    %v123 = vsel %vm122, %v116, 0.0
    %v124 = vsel %vm122, %v117, 0.0
    %v125 = vadd.f32 %v123, %v124
    %v126 = vsel %vm122, %v118, 0.0
    %v127 = vadd.f32 %v125, %v126
    %v128 = vsel %vm122, %v119, 0.0
    %v129 = vadd.f32 %v127, %v128
    %v130 = vrot.slane %v129, 4
    %v131 = vadd.f32 %v129, %v130
    %v132 = vrot.slane %v131, 2
    %v133 = vadd.f32 %v131, %v132
    %v134 = vrot.slane %v133, 1
    %v135 = vadd.f32 %v133, %v134
    %v136 = vrcp.pop 32.0
    %v137 = vmul.f32 %v135, %v136
    %v138 = vmul.f32 %v116, %v116
    %v139 = vmul.f32 %v117, %v117
    %v140 = vmul.f32 %v118, %v118
    %v141 = vmul.f32 %v119, %v119
    %v142 = vsel %vm122, %v138, 0.0
    %v143 = vsel %vm122, %v139, 0.0
    %v144 = vadd.f32 %v142, %v143
    %v145 = vsel %vm122, %v140, 0.0
    %v146 = vadd.f32 %v144, %v145
    %v147 = vsel %vm122, %v141, 0.0
    %v148 = vadd.f32 %v146, %v147
    %v149 = vrot.slane %v148, 4
    %v150 = vadd.f32 %v148, %v149
    %v151 = vrot.slane %v150, 2
    %v152 = vadd.f32 %v150, %v151
    %v153 = vrot.slane %v152, 1
    %v154 = vadd.f32 %v152, %v153
    %v155 = vmul.f32 %v154, %v136
    %v156 = vmul.f32 %v137, %v137
    %v157 = vsub.f32 %v155, %v156
    %v158 = vmax.f32 %v157, 0.0
    %v159 = vsub.f32 %v116, %v137
    %v160 = vsub.f32 %v117, %v137
    %v161 = vsub.f32 %v118, %v137
    %v162 = vsub.f32 %v119, %v137
    %v163 = vadd.f32 %v158, 1e-05
    %v164 = vrsqrt.pop %v163
    %v165 = vmul.f32 %v159, %v164
    %v166 = vmul.f32 %v160, %v164
    %v167 = vmul.f32 %v161, %v164
    %v168 = vmul.f32 %v162, %v164
    %v169 = vmul.f32 %v165, %v120
    %v170 = vmul.f32 %v166, %v120
    %v171 = vmul.f32 %v167, %v120
    %v172 = vmul.f32 %v168, %v120
    %v173 = vadd.f32 %v169, %v121
    %v174 = vadd.f32 %v170, %v121
    %v175 = vadd.f32 %v171, %v121
    %v176 = vadd.f32 %v172, %v121
    %v177 = vpack.c.bf16 %v174, %v173
    %v178 = vpack.c.bf16 %v176, %v175
    %v179 = vld [vmem:[%s2] sm:$0x3]
    %v181 = vsel %vm122, %v177, 0
    %v184 = vsel %vm122, %v178, 0
    %vm186 = vcmask 1041408
    %v188 = vsel %vm186, %v179, 0
    %190 = vmatprep.subr.bf16.mxu0 0
    %191 = vmatpush1.bf16.msra.mxu0 %v188
    %192 = vmatprep.subr.bf16.mxu0 0
    %193 = vmatpush1.bf16.msra.mxu0 0
    %194 = vmatprep.subr.bf16.mxu0 0
    %195 = vmatpush1.bf16.msra.mxu0 0
    %196 = vmatprep.subr.bf16.mxu0 0
    %197 = vmatpush1.bf16.msra.mxu0 0
    %198 = vmatprep.subr.bf16.mxu0 0
    %199 = vmatpush1.bf16.msra.mxu0 0
    %200 = vmatprep.subr.bf16.mxu0 0
    %201 = vmatpush1.bf16.msra.mxu0 0
    %202 = vmatprep.subr.bf16.mxu0 0
    %203 = vmatpush1.bf16.msra.mxu0 0
    %204 = vmatprep.subr.bf16.mxu0 0
    %205 = vmatpush1.bf16.msra.mxu0 0
    %206 = vmatprep.subr.bf16.mxu0 0
    %207 = vmatpush1.bf16.msra.mxu0 0
    %208 = vmatprep.subr.bf16.mxu0 0
    %209 = vmatpush1.bf16.msra.mxu0 0
    %210 = vmatprep.subr.bf16.mxu0 0
    %211 = vmatpush1.bf16.msra.mxu0 0
    %212 = vmatprep.subr.bf16.mxu0 0
    %213 = vmatpush1.bf16.msra.mxu0 0
    %214 = vmatprep.subr.bf16.mxu0 0
    %215 = vmatpush1.bf16.msra.mxu0 0
    %216 = vmatprep.subr.bf16.mxu0 0
    %217 = vmatpush1.bf16.msra.mxu0 0
    %218 = vmatprep.subr.bf16.mxu0 0
    %219 = vmatpush1.bf16.msra.mxu0 0
    %220 = vmatprep.subr.bf16.mxu0 0
    %221 = vmatpush1.bf16.msra.mxu0 0
    %222 = vmatprep.mubr.bf16.mxu0 0
    %223 = vmatmul.mubr.bf16.gmra.mrb[0].mxu0 %v181
    %v224 = vpop.f32.mrb[0].mxu0
    %v225 = vadd.f32 0.0, %v224
    %v226 = vpop.f32.mrb[0].mxu0
    %v227 = vpop.f32.mrb[0].mxu0
    %v228 = vadd.f32 0.0, %v227
    %v229 = vpop.f32.mrb[0].mxu0
    %230 = vmatprep.mubr.bf16.mxu0 0
    %231 = vmatmul.mubr.bf16.gmra.mrb[0].mxu0 %v184
    %v232 = vpop.f32.mrb[0].mxu0
    %v233 = vadd.f32 0.0, %v232
    %v234 = vpop.f32.mrb[0].mxu0
    %v235 = vpop.f32.mrb[0].mxu0
    %v236 = vadd.f32 0.0, %v235
    %v237 = vpop.f32.mrb[0].mxu0
    %238 = vdwg.mxu0
    %v239 = vld [vmem:[#allocation2 + $0x2] ss:$0 sm:$0xff]
    %v240 = vld [vmem:[#allocation2 + $0x3] ss:$0 sm:$0xff]
    %vm241 = vcmask 523264
    %v242 = vsel %vm241, %v225, 0.0
    %v243 = vsel %vm241, %v228, 0.0
    %v244 = vadd.f32 %v242, %v243
    %v245 = vsel %vm241, %v233, 0.0
    %v246 = vadd.f32 %v244, %v245
    %v247 = vsel %vm241, %v236, 0.0
    %v248 = vadd.f32 %v246, %v247
    %v249 = vrot.slane %v248, 4
    %v250 = vadd.f32 %v248, %v249
    %v251 = vrot.slane %v250, 2
    %v252 = vadd.f32 %v250, %v251
    %v253 = vrot.slane %v252, 1
    %v254 = vadd.f32 %v252, %v253
    %v255 = vmul.f32 %v254, %v136
    %v256 = vmul.f32 %v225, %v225
    %v257 = vmul.f32 %v228, %v228
    %v258 = vmul.f32 %v233, %v233
    %v259 = vmul.f32 %v236, %v236
    %v260 = vsel %vm241, %v256, 0.0
    %v261 = vsel %vm241, %v257, 0.0
    %v262 = vadd.f32 %v260, %v261
    %v263 = vsel %vm241, %v258, 0.0
    %v264 = vadd.f32 %v262, %v263
    %v265 = vsel %vm241, %v259, 0.0
    %v266 = vadd.f32 %v264, %v265
    %v267 = vrot.slane %v266, 4
    %v268 = vadd.f32 %v266, %v267
    %v269 = vrot.slane %v268, 2
    %v270 = vadd.f32 %v268, %v269
    %v271 = vrot.slane %v270, 1
    %v272 = vadd.f32 %v270, %v271
    %v273 = vmul.f32 %v272, %v136
    %v274 = vmul.f32 %v255, %v255
    %v275 = vsub.f32 %v273, %v274
    %v276 = vmax.f32 %v275, 0.0
    %v277 = vsub.f32 %v225, %v255
    %v278 = vsub.f32 %v228, %v255
    %v279 = vsub.f32 %v233, %v255
    %v280 = vsub.f32 %v236, %v255
    %v281 = vadd.f32 %v276, 1e-05
    %v282 = vrsqrt.pop %v281
    %v283 = vmul.f32 %v277, %v282
    %v284 = vmul.f32 %v278, %v282
    %v285 = vmul.f32 %v279, %v282
    %v286 = vmul.f32 %v280, %v282
    %v287 = vmul.f32 %v283, %v239
    %v288 = vmul.f32 %v284, %v239
    %v289 = vmul.f32 %v285, %v239
    %v290 = vmul.f32 %v286, %v239
    %v291 = vadd.f32 %v287, %v240
    %v292 = vadd.f32 %v288, %v240
    %v293 = vadd.f32 %v289, %v240
    %v294 = vadd.f32 %v290, %v240
    %v295 = vmax.f32 %v291, 0.0
    %v296 = vmax.f32 %v292, 0.0
    %v297 = vmax.f32 %v293, 0.0
    %v298 = vmax.f32 %v294, 0.0
    %v299 = vpack.c.bf16 %v296, %v295
    %v300 = vpack.c.bf16 %v298, %v297
    %v301 = vld [vmem:[%s3] sm:$0xf]
    %v302 = vld [vmem:[%s3 + $0x4] sm:$0xf]
    %v303 = vld [vmem:[%s3 + $0x8] sm:$0xf]
    %v304 = vld [vmem:[%s3 + $0xc] sm:$0xf]
    %v305 = vld [vmem:[%s3 + $0x10] sm:$0xf]
    %v306 = vld [vmem:[%s3 + $0x14] sm:$0xf]
    %v307 = vld [vmem:[%s3 + $0x18] sm:$0xf]
    %v308 = vld [vmem:[%s3 + $0x1c] sm:$0xf]
    %v317 = vunpack.c.l.b16 %v301
    %v318 = vunpack.c.l.b16 %v302
    %v319 = vunpack.c.l.b16 %v303
    %v320 = vunpack.c.l.b16 %v304
    %v321 = vunpack.c.l.b16 %v305
    %v322 = vunpack.c.l.b16 %v306
    %v323 = vunpack.c.l.b16 %v307
    %v324 = vunpack.c.l.b16 %v308
    %v325 = vpack.c.b16 %v318, %v317
    %v326 = vpack.c.b16 %v320, %v319
    %v327 = vpack.c.b16 %v322, %v321
    %v328 = vpack.c.b16 %v324, %v323
    %v334 = vsel %vm241, %v299, 0
    %v337 = vsel %vm241, %v300, 0
    %339 = vmatprep.subr.bf16.mxu0 0
    %340 = vmatpush1.bf16.msra.mxu0 %v325
    %341 = vmatprep.subr.bf16.mxu0 0
    %342 = vmatpush1.bf16.msra.mxu0 %v326
    %343 = vmatprep.subr.bf16.mxu0 0
    %344 = vmatpush1.bf16.msra.mxu0 %v327
    %345 = vmatprep.subr.bf16.mxu0 0
    %346 = vmatpush1.bf16.msra.mxu0 %v328
    %347 = vmatprep.subr.bf16.mxu0 0
    %348 = vmatpush1.bf16.msra.mxu0 0
    %349 = vmatprep.subr.bf16.mxu0 0
    %350 = vmatpush1.bf16.msra.mxu0 0
    %351 = vmatprep.subr.bf16.mxu0 0
    %352 = vmatpush1.bf16.msra.mxu0 0
    %353 = vmatprep.subr.bf16.mxu0 0
    %354 = vmatpush1.bf16.msra.mxu0 0
    %355 = vmatprep.subr.bf16.mxu0 0
    %356 = vmatpush1.bf16.msra.mxu0 0
    %357 = vmatprep.subr.bf16.mxu0 0
    %358 = vmatpush1.bf16.msra.mxu0 0
    %359 = vmatprep.subr.bf16.mxu0 0
    %360 = vmatpush1.bf16.msra.mxu0 0
    %361 = vmatprep.subr.bf16.mxu0 0
    %362 = vmatpush1.bf16.msra.mxu0 0
    %363 = vmatprep.subr.bf16.mxu0 0
    %364 = vmatpush1.bf16.msra.mxu0 0
    %365 = vmatprep.subr.bf16.mxu0 0
    %366 = vmatpush1.bf16.msra.mxu0 0
    %367 = vmatprep.subr.bf16.mxu0 0
    %368 = vmatpush1.bf16.msra.mxu0 0
    %369 = vmatprep.subr.bf16.mxu0 0
    %370 = vmatpush1.bf16.msra.mxu0 0
    %371 = vmatprep.mubr.bf16.mxu0 0
    %372 = vmatmul.mubr.bf16.gmra.mrb[0].mxu0 %v334
    %v373 = vpop.f32.mrb[0].mxu0
    %v374 = vadd.f32 0.0, %v373
    %v375 = vpop.f32.mrb[0].mxu0
    %v376 = vpop.f32.mrb[0].mxu0
    %v377 = vadd.f32 0.0, %v376
    %v378 = vpop.f32.mrb[0].mxu0
    %379 = vmatprep.mubr.bf16.mxu0 0
    %380 = vmatmul.mubr.bf16.gmra.mrb[0].mxu0 %v337
    %v381 = vpop.f32.mrb[0].mxu0
    %v382 = vadd.f32 0.0, %v381
    %v383 = vpop.f32.mrb[0].mxu0
    %v384 = vpop.f32.mrb[0].mxu0
    %v385 = vadd.f32 0.0, %v384
    %v386 = vpop.f32.mrb[0].mxu0
    %387 = vdwg.mxu0
    %v388 = vld [vmem:[#allocation2 + $0x4] ss:$0 sm:$0xff]
    %v389 = vld [vmem:[#allocation2 + $0x5] ss:$0 sm:$0xff]
    %v390 = vadd.f32 %v374, %v377
    %v391 = vadd.f32 %v390, %v382
    %v392 = vadd.f32 %v391, %v385
    %v393 = vrot.slane %v392, 4
    %v394 = vadd.f32 %v392, %v393
    %v395 = vrot.slane %v394, 2
    %v396 = vadd.f32 %v394, %v395
    %v397 = vrot.slane %v396, 1
    %v398 = vadd.f32 %v396, %v397
    %v399 = vmul.f32 %v398, %v136
    %v400 = vmul.f32 %v374, %v374
    %v401 = vmul.f32 %v377, %v377
    %v402 = vmul.f32 %v382, %v382
    %v403 = vmul.f32 %v385, %v385
    %v404 = vadd.f32 %v400, %v401
    %v405 = vadd.f32 %v404, %v402
    %v406 = vadd.f32 %v405, %v403
    %v407 = vrot.slane %v406, 4
    %v408 = vadd.f32 %v406, %v407
    %v409 = vrot.slane %v408, 2
    %v410 = vadd.f32 %v408, %v409
    %v411 = vrot.slane %v410, 1
    %v412 = vadd.f32 %v410, %v411
    %v413 = vmul.f32 %v412, %v136
    %v414 = vmul.f32 %v399, %v399
    %v415 = vsub.f32 %v413, %v414
    %v416 = vmax.f32 %v415, 0.0
    %v417 = vsub.f32 %v374, %v399
    %v418 = vsub.f32 %v377, %v399
    %v419 = vsub.f32 %v382, %v399
    %v420 = vsub.f32 %v385, %v399
    %v421 = vadd.f32 %v416, 1e-05
    %v422 = vrsqrt.pop %v421
    %v423 = vmul.f32 %v417, %v422
    %v424 = vmul.f32 %v418, %v422
    %v425 = vmul.f32 %v419, %v422
    %v426 = vmul.f32 %v420, %v422
    %v427 = vmul.f32 %v423, %v388
    %v428 = vmul.f32 %v424, %v388
    %v429 = vmul.f32 %v425, %v388
    %v430 = vmul.f32 %v426, %v388
    %v431 = vadd.f32 %v427, %v389
    %v432 = vadd.f32 %v428, %v389
    %v433 = vadd.f32 %v429, %v389
    %v434 = vadd.f32 %v430, %v389
    %v435 = vmax.f32 %v431, 0.0
    %v436 = vmax.f32 %v432, 0.0
    %v437 = vmax.f32 %v433, 0.0
    %v438 = vmax.f32 %v434, 0.0
    %v439 = vpack.c.bf16 %v436, %v435
    %v440 = vpack.c.bf16 %v438, %v437
    %v441 = vld [vmem:[#allocation5] sm:$0xff]
    %v442 = vld [vmem:[#allocation5 + $0x8] sm:$0xff]
    %v443 = vld [vmem:[#allocation5 + $0x10] sm:$0xff]
    %v444 = vld [vmem:[#allocation5 + $0x18] sm:$0xff]
    %v445 = vld [vmem:[#allocation5 + $0x20] sm:$0xff]
    %v446 = vld [vmem:[#allocation5 + $0x28] sm:$0xff]
    %v447 = vld [vmem:[#allocation5 + $0x30] sm:$0xff]
    %v448 = vld [vmem:[#allocation5 + $0x38] sm:$0xff]
    %v449 = vld [vmem:[#allocation5 + $0x40] sm:$0xff]
    %v450 = vld [vmem:[#allocation5 + $0x48] sm:$0xff]
    %v451 = vld [vmem:[#allocation5 + $0x50] sm:$0xff]
    %v452 = vld [vmem:[#allocation5 + $0x58] sm:$0xff]
    %v453 = vld [vmem:[#allocation5 + $0x60] sm:$0xff]
    %v454 = vld [vmem:[#allocation5 + $0x68] sm:$0xff]
    %v455 = vld [vmem:[#allocation5 + $0x70] sm:$0xff]
    %v456 = vld [vmem:[#allocation5 + $0x78] sm:$0xff]
    %v457 = vld [vmem:[#allocation5 + $0x80] sm:$0xff]
    %v458 = vld [vmem:[#allocation5 + $0x88] sm:$0xff]
    %v459 = vld [vmem:[#allocation5 + $0x90] sm:$0xff]
    %v460 = vld [vmem:[#allocation5 + $0x98] sm:$0xff]
    %v461 = vld [vmem:[#allocation5 + $0xa0] sm:$0xff]
    %v462 = vld [vmem:[#allocation5 + $0xa8] sm:$0xff]
    %v463 = vld [vmem:[#allocation5 + $0xb0] sm:$0xff]
    %v464 = vld [vmem:[#allocation5 + $0xb8] sm:$0xff]
    %v465 = vld [vmem:[#allocation5 + $0xc0] sm:$0xff]
    %v466 = vld [vmem:[#allocation5 + $0xc8] sm:$0xff]
    %v467 = vld [vmem:[#allocation5 + $0xd0] sm:$0xff]
    %v468 = vld [vmem:[#allocation5 + $0xd8] sm:$0xff]
    %v469 = vld [vmem:[#allocation5 + $0xe0] sm:$0xff]
    %v470 = vld [vmem:[#allocation5 + $0xe8] sm:$0xff]
    %v471 = vld [vmem:[#allocation5 + $0xf0] sm:$0xff]
    %v472 = vld [vmem:[#allocation5 + $0xf8] sm:$0xff]
    %v505 = vunpack.c.l.b16 %v441
    %v506 = vunpack.c.h.b16 %v441
    %v507 = vunpack.c.l.b16 %v442
    %v508 = vunpack.c.h.b16 %v442
    %v509 = vunpack.c.l.b16 %v443
    %v510 = vunpack.c.h.b16 %v443
    %v511 = vunpack.c.l.b16 %v444
    %v512 = vunpack.c.h.b16 %v444
    %v513 = vunpack.c.l.b16 %v445
    %v514 = vunpack.c.h.b16 %v445
    %v515 = vunpack.c.l.b16 %v446
    %v516 = vunpack.c.h.b16 %v446
    %v517 = vunpack.c.l.b16 %v447
    %v518 = vunpack.c.h.b16 %v447
    %v519 = vunpack.c.l.b16 %v448
    %v520 = vunpack.c.h.b16 %v448
    %v521 = vunpack.c.l.b16 %v449
    %v522 = vunpack.c.h.b16 %v449
    %v523 = vunpack.c.l.b16 %v450
    %v524 = vunpack.c.h.b16 %v450
    %v525 = vunpack.c.l.b16 %v451
    %v526 = vunpack.c.h.b16 %v451
    %v527 = vunpack.c.l.b16 %v452
    %v528 = vunpack.c.h.b16 %v452
    %v529 = vunpack.c.l.b16 %v453
    %v530 = vunpack.c.h.b16 %v453
    %v531 = vunpack.c.l.b16 %v454
    %v532 = vunpack.c.h.b16 %v454
    %v533 = vunpack.c.l.b16 %v455
    %v534 = vunpack.c.h.b16 %v455
    %v535 = vunpack.c.l.b16 %v456
    %v536 = vunpack.c.h.b16 %v456
    %v537 = vunpack.c.l.b16 %v457
    %v538 = vunpack.c.h.b16 %v457
    %v539 = vunpack.c.l.b16 %v458
    %v540 = vunpack.c.h.b16 %v458
    %v541 = vunpack.c.l.b16 %v459
    %v542 = vunpack.c.h.b16 %v459
    %v543 = vunpack.c.l.b16 %v460
    %v544 = vunpack.c.h.b16 %v460
    %v545 = vunpack.c.l.b16 %v461
    %v546 = vunpack.c.h.b16 %v461
    %v547 = vunpack.c.l.b16 %v462
    %v548 = vunpack.c.h.b16 %v462
    %v549 = vunpack.c.l.b16 %v463
    %v550 = vunpack.c.h.b16 %v463
    %v551 = vunpack.c.l.b16 %v464
    %v552 = vunpack.c.h.b16 %v464
    %v553 = vunpack.c.l.b16 %v465
    %v554 = vunpack.c.h.b16 %v465
    %v555 = vunpack.c.l.b16 %v466
    %v556 = vunpack.c.h.b16 %v466
    %v557 = vunpack.c.l.b16 %v467
    %v558 = vunpack.c.h.b16 %v467
    %v559 = vunpack.c.l.b16 %v468
    %v560 = vunpack.c.h.b16 %v468
    %v561 = vunpack.c.l.b16 %v469
    %v562 = vunpack.c.h.b16 %v469
    %v563 = vunpack.c.l.b16 %v470
    %v564 = vunpack.c.h.b16 %v470
    %v565 = vunpack.c.l.b16 %v471
    %v566 = vunpack.c.h.b16 %v471
    %v567 = vunpack.c.l.b16 %v472
    %v568 = vunpack.c.h.b16 %v472
    %v569 = vpack.c.b16 %v509, %v505
    %v570 = vpack.c.b16 %v510, %v506
    %v571 = vpack.c.b16 %v511, %v507
    %v572 = vpack.c.b16 %v512, %v508
    %v573 = vpack.c.b16 %v517, %v513
    %v574 = vpack.c.b16 %v518, %v514
    %v575 = vpack.c.b16 %v519, %v515
    %v576 = vpack.c.b16 %v520, %v516
    %v577 = vpack.c.b16 %v525, %v521
    %v578 = vpack.c.b16 %v526, %v522
    %v579 = vpack.c.b16 %v527, %v523
    %v580 = vpack.c.b16 %v528, %v524
    %v581 = vpack.c.b16 %v533, %v529
    %v582 = vpack.c.b16 %v534, %v530
    %v583 = vpack.c.b16 %v535, %v531
    %v584 = vpack.c.b16 %v536, %v532
    %v585 = vpack.c.b16 %v541, %v537
    %v586 = vpack.c.b16 %v542, %v538
    %v587 = vpack.c.b16 %v543, %v539
    %v588 = vpack.c.b16 %v544, %v540
    %v589 = vpack.c.b16 %v549, %v545
    %v590 = vpack.c.b16 %v550, %v546
    %v591 = vpack.c.b16 %v551, %v547
    %v592 = vpack.c.b16 %v552, %v548
    %v593 = vpack.c.b16 %v557, %v553
    %v594 = vpack.c.b16 %v558, %v554
    %v595 = vpack.c.b16 %v559, %v555
    %v596 = vpack.c.b16 %v560, %v556
    %v597 = vpack.c.b16 %v565, %v561
    %v598 = vpack.c.b16 %v566, %v562
    %v599 = vpack.c.b16 %v567, %v563
    %v600 = vpack.c.b16 %v568, %v564
    %633 = vmatprep.subr.bf16.mxu0 %v570
    %634 = vmatpush1.bf16.msra.mxu0 %v569
    %635 = vmatprep.subr.bf16.mxu0 %v574
    %636 = vmatpush1.bf16.msra.mxu0 %v573
    %637 = vmatprep.subr.bf16.mxu0 %v578
    %638 = vmatpush1.bf16.msra.mxu0 %v577
    %639 = vmatprep.subr.bf16.mxu0 %v582
    %640 = vmatpush1.bf16.msra.mxu0 %v581
    %641 = vmatprep.subr.bf16.mxu0 %v586
    %642 = vmatpush1.bf16.msra.mxu0 %v585
    %643 = vmatprep.subr.bf16.mxu0 %v590
    %644 = vmatpush1.bf16.msra.mxu0 %v589
    %645 = vmatprep.subr.bf16.mxu0 %v594
    %646 = vmatpush1.bf16.msra.mxu0 %v593
    %647 = vmatprep.subr.bf16.mxu0 %v598
    %648 = vmatpush1.bf16.msra.mxu0 %v597
    %649 = vmatprep.subr.bf16.mxu0 0
    %650 = vmatpush1.bf16.msra.mxu0 0
    %651 = vmatprep.subr.bf16.mxu0 0
    %652 = vmatpush1.bf16.msra.mxu0 0
    %653 = vmatprep.subr.bf16.mxu0 0
    %654 = vmatpush1.bf16.msra.mxu0 0
    %655 = vmatprep.subr.bf16.mxu0 0
    %656 = vmatpush1.bf16.msra.mxu0 0
    %657 = vmatprep.subr.bf16.mxu0 0
    %658 = vmatpush1.bf16.msra.mxu0 0
    %659 = vmatprep.subr.bf16.mxu0 0
    %660 = vmatpush1.bf16.msra.mxu0 0
    %661 = vmatprep.subr.bf16.mxu0 0
    %662 = vmatpush1.bf16.msra.mxu0 0
    %663 = vmatprep.subr.bf16.mxu0 0
    %664 = vmatpush1.bf16.msra.mxu0 0
    %665 = vmatprep.mubr.bf16.mxu0 0
    %666 = vmatmul.mubr.bf16.gmra.mrb[0].mxu0 %v439
    %v667 = vpop.f32.mrb[0].mxu0
    %v668 = vadd.f32 0.0, %v667
    %v669 = vpop.f32.mrb[0].mxu0
    %v670 = vadd.f32 0.0, %v669
    %v671 = vpop.f32.mrb[0].mxu0
    %v672 = vadd.f32 0.0, %v671
    %v673 = vpop.f32.mrb[0].mxu0
    %v674 = vadd.f32 0.0, %v673
    %675 = vmatprep.mubr.bf16.mxu0 0
    %676 = vmatmul.mubr.bf16.gmra.mrb[0].mxu0 %v440
    %v677 = vpop.f32.mrb[0].mxu0
    %v678 = vadd.f32 0.0, %v677
    %v679 = vpop.f32.mrb[0].mxu0
    %v680 = vadd.f32 0.0, %v679
    %v681 = vpop.f32.mrb[0].mxu0
    %v682 = vadd.f32 0.0, %v681
    %v683 = vpop.f32.mrb[0].mxu0
    %v684 = vadd.f32 0.0, %v683
    %685 = vdwg.mxu0
    %686 = vmatprep.subr.bf16.mxu0 %v572
    %687 = vmatpush1.bf16.msra.mxu0 %v571
    %688 = vmatprep.subr.bf16.mxu0 %v576
    %689 = vmatpush1.bf16.msra.mxu0 %v575
    %690 = vmatprep.subr.bf16.mxu0 %v580
    %691 = vmatpush1.bf16.msra.mxu0 %v579
    %692 = vmatprep.subr.bf16.mxu0 %v584
    %693 = vmatpush1.bf16.msra.mxu0 %v583
    %694 = vmatprep.subr.bf16.mxu0 %v588
    %695 = vmatpush1.bf16.msra.mxu0 %v587
    %696 = vmatprep.subr.bf16.mxu0 %v592
    %697 = vmatpush1.bf16.msra.mxu0 %v591
    %698 = vmatprep.subr.bf16.mxu0 %v596
    %699 = vmatpush1.bf16.msra.mxu0 %v595
    %700 = vmatprep.subr.bf16.mxu0 %v600
    %701 = vmatpush1.bf16.msra.mxu0 %v599
    %702 = vmatprep.subr.bf16.mxu0 0
    %703 = vmatpush1.bf16.msra.mxu0 0
    %704 = vmatprep.subr.bf16.mxu0 0
    %705 = vmatpush1.bf16.msra.mxu0 0
    %706 = vmatprep.subr.bf16.mxu0 0
    %707 = vmatpush1.bf16.msra.mxu0 0
    %708 = vmatprep.subr.bf16.mxu0 0
    %709 = vmatpush1.bf16.msra.mxu0 0
    %710 = vmatprep.subr.bf16.mxu0 0
    %711 = vmatpush1.bf16.msra.mxu0 0
    %712 = vmatprep.subr.bf16.mxu0 0
    %713 = vmatpush1.bf16.msra.mxu0 0
    %714 = vmatprep.subr.bf16.mxu0 0
    %715 = vmatpush1.bf16.msra.mxu0 0
    %716 = vmatprep.subr.bf16.mxu0 0
    %717 = vmatpush1.bf16.msra.mxu0 0
    %718 = vmatprep.mubr.bf16.mxu0 0
    %719 = vmatmul.mubr.bf16.gmra.mrb[0].mxu0 %v439
    %v720 = vpop.f32.mrb[0].mxu0
    %v721 = vadd.f32 0.0, %v720
    %v722 = vpop.f32.mrb[0].mxu0
    %v723 = vadd.f32 0.0, %v722
    %v724 = vpop.f32.mrb[0].mxu0
    %v725 = vadd.f32 0.0, %v724
    %v726 = vpop.f32.mrb[0].mxu0
    %v727 = vadd.f32 0.0, %v726
    %728 = vmatprep.mubr.bf16.mxu0 0
    %729 = vmatmul.mubr.bf16.gmra.mrb[0].mxu0 %v440
    %v730 = vpop.f32.mrb[0].mxu0
    %v731 = vadd.f32 0.0, %v730
    %v732 = vpop.f32.mrb[0].mxu0
    %v733 = vadd.f32 0.0, %v732
    %v734 = vpop.f32.mrb[0].mxu0
    %v735 = vadd.f32 0.0, %v734
    %v736 = vpop.f32.mrb[0].mxu0
    %v737 = vadd.f32 0.0, %v736
    %738 = vdwg.mxu0
    %s739 = scalar_lea.vmem [#allocation2], 6
    %v740 = vld [vmem:[%s739] ss:$8 sm:$0xf]
    %s741 = scalar_lea.vmem [#allocation2], 7
    %v742 = vld [vmem:[%s741] ss:$8 sm:$0xf]
    %v743 = vadd.f32 %v668, %v672
    %v744 = vadd.f32 %v743, %v678
    %v745 = vadd.f32 %v744, %v682
    %v746 = vrot.slane %v745, 4
    %v747 = vadd.f32 %v745, %v746
    %v748 = vrot.slane %v747, 2
    %v749 = vadd.f32 %v747, %v748
    %v750 = vrot.slane %v749, 1
    %v751 = vadd.f32 %v749, %v750
    %v752 = vadd.f32 %v670, %v674
    %v753 = vadd.f32 %v752, %v680
    %v754 = vadd.f32 %v753, %v684
    %v755 = vrot.slane %v754, 4
    %v756 = vadd.f32 %v754, %v755
    %v757 = vrot.slane %v756, 2
    %v758 = vadd.f32 %v756, %v757
    %v759 = vrot.slane %v758, 1
    %v760 = vadd.f32 %v758, %v759
    %v761 = vadd.f32 %v721, %v725
    %v762 = vadd.f32 %v761, %v731
    %v763 = vadd.f32 %v762, %v735
    %v764 = vrot.slane %v763, 4
    %v765 = vadd.f32 %v763, %v764
    %v766 = vrot.slane %v765, 2
    %v767 = vadd.f32 %v765, %v766
    %v768 = vrot.slane %v767, 1
    %v769 = vadd.f32 %v767, %v768
    %v770 = vadd.f32 %v723, %v727
    %v771 = vadd.f32 %v770, %v733
    %v772 = vadd.f32 %v771, %v737
    %v773 = vrot.slane %v772, 4
    %v774 = vadd.f32 %v772, %v773
    %v775 = vrot.slane %v774, 2
    %v776 = vadd.f32 %v774, %v775
    %v777 = vrot.slane %v776, 1
    %v778 = vadd.f32 %v776, %v777
    %v779 = vmul.f32 %v751, %v136
    %v780 = vmul.f32 %v760, %v136
    %v781 = vmul.f32 %v769, %v136
    %v782 = vmul.f32 %v778, %v136
    %v783 = vmul.f32 %v668, %v668
    %v784 = vmul.f32 %v670, %v670
    %v785 = vmul.f32 %v721, %v721
    %v786 = vmul.f32 %v723, %v723
    %v787 = vmul.f32 %v672, %v672
    %v788 = vmul.f32 %v674, %v674
    %v789 = vmul.f32 %v725, %v725
    %v790 = vmul.f32 %v727, %v727
    %v791 = vmul.f32 %v678, %v678
    %v792 = vmul.f32 %v680, %v680
    %v793 = vmul.f32 %v731, %v731
    %v794 = vmul.f32 %v733, %v733
    %v795 = vmul.f32 %v682, %v682
    %v796 = vmul.f32 %v684, %v684
    %v797 = vmul.f32 %v735, %v735
    %v798 = vmul.f32 %v737, %v737
    %v799 = vadd.f32 %v783, %v787
    %v800 = vadd.f32 %v799, %v791
    %v801 = vadd.f32 %v800, %v795
    %v802 = vrot.slane %v801, 4
    %v803 = vadd.f32 %v801, %v802
    %v804 = vrot.slane %v803, 2
    %v805 = vadd.f32 %v803, %v804
    %v806 = vrot.slane %v805, 1
    %v807 = vadd.f32 %v805, %v806
    %v808 = vadd.f32 %v784, %v788
    %v809 = vadd.f32 %v808, %v792
    %v810 = vadd.f32 %v809, %v796
    %v811 = vrot.slane %v810, 4
    %v812 = vadd.f32 %v810, %v811
    %v813 = vrot.slane %v812, 2
    %v814 = vadd.f32 %v812, %v813
    %v815 = vrot.slane %v814, 1
    %v816 = vadd.f32 %v814, %v815
    %v817 = vadd.f32 %v785, %v789
    %v818 = vadd.f32 %v817, %v793
    %v819 = vadd.f32 %v818, %v797
    %v820 = vrot.slane %v819, 4
    %v821 = vadd.f32 %v819, %v820
    %v822 = vrot.slane %v821, 2
    %v823 = vadd.f32 %v821, %v822
    %v824 = vrot.slane %v823, 1
    %v825 = vadd.f32 %v823, %v824
    %v826 = vadd.f32 %v786, %v790
    %v827 = vadd.f32 %v826, %v794
    %v828 = vadd.f32 %v827, %v798
    %v829 = vrot.slane %v828, 4
    %v830 = vadd.f32 %v828, %v829
    %v831 = vrot.slane %v830, 2
    %v832 = vadd.f32 %v830, %v831
    %v833 = vrot.slane %v832, 1
    %v834 = vadd.f32 %v832, %v833
    %v835 = vmul.f32 %v807, %v136
    %v836 = vmul.f32 %v816, %v136
    %v837 = vmul.f32 %v825, %v136
    %v838 = vmul.f32 %v834, %v136
    %v839 = vmul.f32 %v779, %v779
    %v840 = vmul.f32 %v780, %v780
    %v841 = vmul.f32 %v781, %v781
    %v842 = vmul.f32 %v782, %v782
    %v843 = vsub.f32 %v835, %v839
    %v844 = vsub.f32 %v836, %v840
    %v845 = vsub.f32 %v837, %v841
    %v846 = vsub.f32 %v838, %v842
    %v847 = vmax.f32 %v843, 0.0
    %v848 = vmax.f32 %v844, 0.0
    %v849 = vmax.f32 %v845, 0.0
    %v850 = vmax.f32 %v846, 0.0
    %v851 = vsub.f32 %v668, %v779
    %v852 = vsub.f32 %v670, %v780
    %v853 = vsub.f32 %v721, %v781
    %v854 = vsub.f32 %v723, %v782
    %v855 = vsub.f32 %v672, %v779
    %v856 = vsub.f32 %v674, %v780
    %v857 = vsub.f32 %v725, %v781
    %v858 = vsub.f32 %v727, %v782
    %v859 = vsub.f32 %v678, %v779
    %v860 = vsub.f32 %v680, %v780
    %v861 = vsub.f32 %v731, %v781
    %v862 = vsub.f32 %v733, %v782
    %v863 = vsub.f32 %v682, %v779
    %v864 = vsub.f32 %v684, %v780
    %v865 = vsub.f32 %v735, %v781
    %v866 = vsub.f32 %v737, %v782
    %v867 = vadd.f32 %v847, 1e-05
    %v868 = vadd.f32 %v848, 1e-05
    %v869 = vadd.f32 %v849, 1e-05
    %v870 = vadd.f32 %v850, 1e-05
    %v871 = vrsqrt.pop %v867
    %v872 = vrsqrt.pop %v868
    %v873 = vrsqrt.pop %v869
    %v874 = vrsqrt.pop %v870
    %v875 = vmul.f32 %v851, %v871
    %v876 = vmul.f32 %v852, %v872
    %v877 = vmul.f32 %v853, %v873
    %v878 = vmul.f32 %v854, %v874
    %v879 = vmul.f32 %v855, %v871
    %v880 = vmul.f32 %v856, %v872
    %v881 = vmul.f32 %v857, %v873
    %v882 = vmul.f32 %v858, %v874
    %v883 = vmul.f32 %v859, %v871
    %v884 = vmul.f32 %v860, %v872
    %v885 = vmul.f32 %v861, %v873
    %v886 = vmul.f32 %v862, %v874
    %v887 = vmul.f32 %v863, %v871
    %v888 = vmul.f32 %v864, %v872
    %v889 = vmul.f32 %v865, %v873
    %v890 = vmul.f32 %v866, %v874
    %v892 = vlaneseq
    %v893 = vshrl.u32 %v892, 7
    %v894 = vsub.s32 0, %v893
    %v895 = vrot.slane %v740, %v894
    %v896 = vlaneseq
    %v897 = vshrl.u32 %v896, 7
    %v898 = vsub.s32 1, %v897
    %v899 = vrot.slane %v740, %v898
    %v900 = vlaneseq
    %v901 = vshrl.u32 %v900, 7
    %v902 = vsub.s32 2, %v901
    %v903 = vrot.slane %v740, %v902
    %v904 = vlaneseq
    %v905 = vshrl.u32 %v904, 7
    %v906 = vsub.s32 3, %v905
    %v907 = vrot.slane %v740, %v906
    %v912 = vmul.f32 %v875, %v895
    %v913 = vmul.f32 %v876, %v899
    %v914 = vmul.f32 %v877, %v903
    %v915 = vmul.f32 %v878, %v907
    %v916 = vmul.f32 %v879, %v895
    %v917 = vmul.f32 %v880, %v899
    %v918 = vmul.f32 %v881, %v903
    %v919 = vmul.f32 %v882, %v907
    %v920 = vmul.f32 %v883, %v895
    %v921 = vmul.f32 %v884, %v899
    %v922 = vmul.f32 %v885, %v903
    %v923 = vmul.f32 %v886, %v907
    %v924 = vmul.f32 %v887, %v895
    %v925 = vmul.f32 %v888, %v899
    %v926 = vmul.f32 %v889, %v903
    %v927 = vmul.f32 %v890, %v907
    %v929 = vlaneseq
    %v930 = vshrl.u32 %v929, 7
    %v931 = vsub.s32 0, %v930
    %v932 = vrot.slane %v742, %v931
    %v933 = vlaneseq
    %v934 = vshrl.u32 %v933, 7
    %v935 = vsub.s32 1, %v934
    %v936 = vrot.slane %v742, %v935
    %v937 = vlaneseq
    %v938 = vshrl.u32 %v937, 7
    %v939 = vsub.s32 2, %v938
    %v940 = vrot.slane %v742, %v939
    %v941 = vlaneseq
    %v942 = vshrl.u32 %v941, 7
    %v943 = vsub.s32 3, %v942
    %v944 = vrot.slane %v742, %v943
    %v949 = vadd.f32 %v912, %v932
    %v950 = vadd.f32 %v913, %v936
    %v951 = vadd.f32 %v914, %v940
    %v952 = vadd.f32 %v915, %v944
    %v953 = vadd.f32 %v916, %v932
    %v954 = vadd.f32 %v917, %v936
    %v955 = vadd.f32 %v918, %v940
    %v956 = vadd.f32 %v919, %v944
    %v957 = vadd.f32 %v920, %v932
    %v958 = vadd.f32 %v921, %v936
    %v959 = vadd.f32 %v922, %v940
    %v960 = vadd.f32 %v923, %v944
    %v961 = vadd.f32 %v924, %v932
    %v962 = vadd.f32 %v925, %v936
    %v963 = vadd.f32 %v926, %v940
    %v964 = vadd.f32 %v927, %v944
    %v965 = vmax.f32 %v949, %v953
    %v966 = vrot.slane %v965, 4
    %v967 = vmax.f32 %v965, %v966
    %v968 = vrot.slane %v967, 2
    %v969 = vmax.f32 %v967, %v968
    %v970 = vrot.slane %v969, 1
    %v971 = vmax.f32 %v969, %v970
    %v972 = vmax.f32 %v950, %v954
    %v973 = vrot.slane %v972, 4
    %v974 = vmax.f32 %v972, %v973
    %v975 = vrot.slane %v974, 2
    %v976 = vmax.f32 %v974, %v975
    %v977 = vrot.slane %v976, 1
    %v978 = vmax.f32 %v976, %v977
    %v979 = vmax.f32 %v951, %v955
    %v980 = vrot.slane %v979, 4
    %v981 = vmax.f32 %v979, %v980
    %v982 = vrot.slane %v981, 2
    %v983 = vmax.f32 %v981, %v982
    %v984 = vrot.slane %v983, 1
    %v985 = vmax.f32 %v983, %v984
    %v986 = vmax.f32 %v952, %v956
    %v987 = vrot.slane %v986, 4
    %v988 = vmax.f32 %v986, %v987
    %v989 = vrot.slane %v988, 2
    %v990 = vmax.f32 %v988, %v989
    %v991 = vrot.slane %v990, 1
    %v992 = vmax.f32 %v990, %v991
    %v993 = vmax.f32 %v957, %v961
    %v994 = vrot.slane %v993, 4
    %v995 = vmax.f32 %v993, %v994
    %v996 = vrot.slane %v995, 2
    %v997 = vmax.f32 %v995, %v996
    %v998 = vrot.slane %v997, 1
    %v999 = vmax.f32 %v997, %v998
    %v1000 = vmax.f32 %v958, %v962
    %v1001 = vrot.slane %v1000, 4
    %v1002 = vmax.f32 %v1000, %v1001
    %v1003 = vrot.slane %v1002, 2
    %v1004 = vmax.f32 %v1002, %v1003
    %v1005 = vrot.slane %v1004, 1
    %v1006 = vmax.f32 %v1004, %v1005
    %v1007 = vmax.f32 %v959, %v963
    %v1008 = vrot.slane %v1007, 4
    %v1009 = vmax.f32 %v1007, %v1008
    %v1010 = vrot.slane %v1009, 2
    %v1011 = vmax.f32 %v1009, %v1010
    %v1012 = vrot.slane %v1011, 1
    %v1013 = vmax.f32 %v1011, %v1012
    %v1014 = vmax.f32 %v960, %v964
    %v1015 = vrot.slane %v1014, 4
    %v1016 = vmax.f32 %v1014, %v1015
    %v1017 = vrot.slane %v1016, 2
    %v1018 = vmax.f32 %v1016, %v1017
    %v1019 = vrot.slane %v1018, 1
    %v1020 = vmax.f32 %v1018, %v1019
    %v1021 = vpack.c.bf16 %v971, %v971
    %v1022 = vpack.c.bf16 %v978, %v978
    %v1023 = vpack.c.bf16 %v985, %v985
    %v1024 = vpack.c.bf16 %v992, %v992
    %v1025 = vpack.c.bf16 %v999, %v999
    %v1026 = vpack.c.bf16 %v1006, %v1006
    %v1027 = vpack.c.bf16 %v1013, %v1013
    %v1028 = vpack.c.bf16 %v1020, %v1020
    %v1029 = vld [vmem:[#allocation7] sm:$0xff]
    %v1030 = vld [vmem:[#allocation7 + $0x8] sm:$0xff]
    %v1031 = vld [vmem:[#allocation7 + $0x10] sm:$0xff]
    %v1032 = vld [vmem:[#allocation7 + $0x18] sm:$0xff]
    %v1033 = vld [vmem:[#allocation7 + $0x20] sm:$0xff]
    %v1034 = vld [vmem:[#allocation7 + $0x28] sm:$0xff]
    %v1035 = vld [vmem:[#allocation7 + $0x30] sm:$0xff]
    %v1036 = vld [vmem:[#allocation7 + $0x38] sm:$0xff]
    %v1037 = vld [vmem:[#allocation7 + $0x40] sm:$0xff]
    %v1038 = vld [vmem:[#allocation7 + $0x48] sm:$0xff]
    %v1039 = vld [vmem:[#allocation7 + $0x50] sm:$0xff]
    %v1040 = vld [vmem:[#allocation7 + $0x58] sm:$0xff]
    %v1041 = vld [vmem:[#allocation7 + $0x60] sm:$0xff]
    %v1042 = vld [vmem:[#allocation7 + $0x68] sm:$0xff]
    %v1043 = vld [vmem:[#allocation7 + $0x70] sm:$0xff]
    %v1044 = vld [vmem:[#allocation7 + $0x78] sm:$0xff]
    %v1045 = vld [vmem:[#allocation7 + $0x80] sm:$0xff]
    %v1046 = vld [vmem:[#allocation7 + $0x88] sm:$0xff]
    %v1047 = vld [vmem:[#allocation7 + $0x90] sm:$0xff]
    %v1048 = vld [vmem:[#allocation7 + $0x98] sm:$0xff]
    %v1049 = vld [vmem:[#allocation7 + $0xa0] sm:$0xff]
    %v1050 = vld [vmem:[#allocation7 + $0xa8] sm:$0xff]
    %v1051 = vld [vmem:[#allocation7 + $0xb0] sm:$0xff]
    %v1052 = vld [vmem:[#allocation7 + $0xb8] sm:$0xff]
    %v1053 = vld [vmem:[#allocation7 + $0xc0] sm:$0xff]
    %v1054 = vld [vmem:[#allocation7 + $0xc8] sm:$0xff]
    %v1055 = vld [vmem:[#allocation7 + $0xd0] sm:$0xff]
    %v1056 = vld [vmem:[#allocation7 + $0xd8] sm:$0xff]
    %v1057 = vld [vmem:[#allocation7 + $0xe0] sm:$0xff]
    %v1058 = vld [vmem:[#allocation7 + $0xe8] sm:$0xff]
    %v1059 = vld [vmem:[#allocation7 + $0xf0] sm:$0xff]
    %v1060 = vld [vmem:[#allocation7 + $0xf8] sm:$0xff]
    %v1061 = vld [vmem:[#allocation7 + $0x100] sm:$0xff]
    %v1062 = vld [vmem:[#allocation7 + $0x108] sm:$0xff]
    %v1063 = vld [vmem:[#allocation7 + $0x110] sm:$0xff]
    %v1064 = vld [vmem:[#allocation7 + $0x118] sm:$0xff]
    %v1065 = vld [vmem:[#allocation7 + $0x120] sm:$0xff]
    %v1066 = vld [vmem:[#allocation7 + $0x128] sm:$0xff]
    %v1067 = vld [vmem:[#allocation7 + $0x130] sm:$0xff]
    %v1068 = vld [vmem:[#allocation7 + $0x138] sm:$0xff]
    %v1069 = vld [vmem:[#allocation7 + $0x140] sm:$0xff]
    %v1070 = vld [vmem:[#allocation7 + $0x148] sm:$0xff]
    %v1071 = vld [vmem:[#allocation7 + $0x150] sm:$0xff]
    %v1072 = vld [vmem:[#allocation7 + $0x158] sm:$0xff]
    %v1073 = vld [vmem:[#allocation7 + $0x160] sm:$0xff]
    %v1074 = vld [vmem:[#allocation7 + $0x168] sm:$0xff]
    %v1075 = vld [vmem:[#allocation7 + $0x170] sm:$0xff]
    %v1076 = vld [vmem:[#allocation7 + $0x178] sm:$0xff]
    %v1077 = vld [vmem:[#allocation7 + $0x180] sm:$0xff]
    %v1078 = vld [vmem:[#allocation7 + $0x188] sm:$0xff]
    %v1079 = vld [vmem:[#allocation7 + $0x190] sm:$0xff]
    %v1080 = vld [vmem:[#allocation7 + $0x198] sm:$0xff]
    %v1081 = vld [vmem:[#allocation7 + $0x1a0] sm:$0xff]
    %v1082 = vld [vmem:[#allocation7 + $0x1a8] sm:$0xff]
    %v1083 = vld [vmem:[#allocation7 + $0x1b0] sm:$0xff]
    %v1084 = vld [vmem:[#allocation7 + $0x1b8] sm:$0xff]
    %v1085 = vld [vmem:[#allocation7 + $0x1c0] sm:$0xff]
    %v1086 = vld [vmem:[#allocation7 + $0x1c8] sm:$0xff]
    %v1087 = vld [vmem:[#allocation7 + $0x1d0] sm:$0xff]
    %v1088 = vld [vmem:[#allocation7 + $0x1d8] sm:$0xff]
    %v1089 = vld [vmem:[#allocation7 + $0x1e0] sm:$0xff]
    %v1090 = vld [vmem:[#allocation7 + $0x1e8] sm:$0xff]
    %v1091 = vld [vmem:[#allocation7 + $0x1f0] sm:$0xff]
    %v1092 = vld [vmem:[#allocation7 + $0x1f8] sm:$0xff]
    %v1101 = vunpack.c.l.b16 %v1021
    %v1102 = vunpack.c.l.b16 %v1022
    %v1103 = vunpack.c.l.b16 %v1023
    %v1104 = vunpack.c.l.b16 %v1024
    %v1105 = vunpack.c.l.b16 %v1025
    %v1106 = vunpack.c.l.b16 %v1026
    %v1107 = vunpack.c.l.b16 %v1027
    %v1108 = vunpack.c.l.b16 %v1028
    %vm1109 = vcmask 1041409
    %v1110 = vsel %vm1109, %v1105, %v1101
    %v1111 = vsel %vm1109, %v1106, %v1102
    %v1112 = vsel %vm1109, %v1107, %v1103
    %v1113 = vsel %vm1109, %v1108, %v1104
    %v1114 = vpack.c.b16 %v1110, %v1110
    %v1115 = vpack.c.b16 %v1111, %v1111
    %v1116 = vpack.c.b16 %v1112, %v1112
    %v1117 = vpack.c.b16 %v1113, %v1113
    %v1186 = vunpack.c.l.b16 %v1029
    %v1187 = vunpack.c.h.b16 %v1029
    %v1188 = vunpack.c.l.b16 %v1030
    %v1189 = vunpack.c.h.b16 %v1030
    %v1190 = vunpack.c.l.b16 %v1031
    %v1191 = vunpack.c.h.b16 %v1031
    %v1192 = vunpack.c.l.b16 %v1032
    %v1193 = vunpack.c.h.b16 %v1032
    %v1194 = vunpack.c.l.b16 %v1033
    %v1195 = vunpack.c.h.b16 %v1033
    %v1196 = vunpack.c.l.b16 %v1034
    %v1197 = vunpack.c.h.b16 %v1034
    %v1198 = vunpack.c.l.b16 %v1035
    %v1199 = vunpack.c.h.b16 %v1035
    %v1200 = vunpack.c.l.b16 %v1036
    %v1201 = vunpack.c.h.b16 %v1036
    %v1202 = vunpack.c.l.b16 %v1037
    %v1203 = vunpack.c.h.b16 %v1037
    %v1204 = vunpack.c.l.b16 %v1038
    %v1205 = vunpack.c.h.b16 %v1038
    %v1206 = vunpack.c.l.b16 %v1039
    %v1207 = vunpack.c.h.b16 %v1039
    %v1208 = vunpack.c.l.b16 %v1040
    %v1209 = vunpack.c.h.b16 %v1040
    %v1210 = vunpack.c.l.b16 %v1041
    %v1211 = vunpack.c.h.b16 %v1041
    %v1212 = vunpack.c.l.b16 %v1042
    %v1213 = vunpack.c.h.b16 %v1042
    %v1214 = vunpack.c.l.b16 %v1043
    %v1215 = vunpack.c.h.b16 %v1043
    %v1216 = vunpack.c.l.b16 %v1044
    %v1217 = vunpack.c.h.b16 %v1044
    %v1218 = vunpack.c.l.b16 %v1045
    %v1219 = vunpack.c.h.b16 %v1045
    %v1220 = vunpack.c.l.b16 %v1046
    %v1221 = vunpack.c.h.b16 %v1046
    %v1222 = vunpack.c.l.b16 %v1047
    %v1223 = vunpack.c.h.b16 %v1047
    %v1224 = vunpack.c.l.b16 %v1048
    %v1225 = vunpack.c.h.b16 %v1048
    %v1226 = vunpack.c.l.b16 %v1049
    %v1227 = vunpack.c.h.b16 %v1049
    %v1228 = vunpack.c.l.b16 %v1050
    %v1229 = vunpack.c.h.b16 %v1050
    %v1230 = vunpack.c.l.b16 %v1051
    %v1231 = vunpack.c.h.b16 %v1051
    %v1232 = vunpack.c.l.b16 %v1052
    %v1233 = vunpack.c.h.b16 %v1052
    %v1234 = vunpack.c.l.b16 %v1053
    %v1235 = vunpack.c.h.b16 %v1053
    %v1236 = vunpack.c.l.b16 %v1054
    %v1237 = vunpack.c.h.b16 %v1054
    %v1238 = vunpack.c.l.b16 %v1055
    %v1239 = vunpack.c.h.b16 %v1055
    %v1240 = vunpack.c.l.b16 %v1056
    %v1241 = vunpack.c.h.b16 %v1056
    %v1242 = vunpack.c.l.b16 %v1057
    %v1243 = vunpack.c.h.b16 %v1057
    %v1244 = vunpack.c.l.b16 %v1058
    %v1245 = vunpack.c.h.b16 %v1058
    %v1246 = vunpack.c.l.b16 %v1059
    %v1247 = vunpack.c.h.b16 %v1059
    %v1248 = vunpack.c.l.b16 %v1060
    %v1249 = vunpack.c.h.b16 %v1060
    %v1250 = vunpack.c.l.b16 %v1061
    %v1251 = vunpack.c.h.b16 %v1061
    %v1252 = vunpack.c.l.b16 %v1062
    %v1253 = vunpack.c.h.b16 %v1062
    %v1254 = vunpack.c.l.b16 %v1063
    %v1255 = vunpack.c.h.b16 %v1063
    %v1256 = vunpack.c.l.b16 %v1064
    %v1257 = vunpack.c.h.b16 %v1064
    %v1258 = vunpack.c.l.b16 %v1065
    %v1259 = vunpack.c.h.b16 %v1065
    %v1260 = vunpack.c.l.b16 %v1066
    %v1261 = vunpack.c.h.b16 %v1066
    %v1262 = vunpack.c.l.b16 %v1067
    %v1263 = vunpack.c.h.b16 %v1067
    %v1264 = vunpack.c.l.b16 %v1068
    %v1265 = vunpack.c.h.b16 %v1068
    %v1266 = vunpack.c.l.b16 %v1069
    %v1267 = vunpack.c.h.b16 %v1069
    %v1268 = vunpack.c.l.b16 %v1070
    %v1269 = vunpack.c.h.b16 %v1070
    %v1270 = vunpack.c.l.b16 %v1071
    %v1271 = vunpack.c.h.b16 %v1071
    %v1272 = vunpack.c.l.b16 %v1072
    %v1273 = vunpack.c.h.b16 %v1072
    %v1274 = vunpack.c.l.b16 %v1073
    %v1275 = vunpack.c.h.b16 %v1073
    %v1276 = vunpack.c.l.b16 %v1074
    %v1277 = vunpack.c.h.b16 %v1074
    %v1278 = vunpack.c.l.b16 %v1075
    %v1279 = vunpack.c.h.b16 %v1075
    %v1280 = vunpack.c.l.b16 %v1076
    %v1281 = vunpack.c.h.b16 %v1076
    %v1282 = vunpack.c.l.b16 %v1077
    %v1283 = vunpack.c.h.b16 %v1077
    %v1284 = vunpack.c.l.b16 %v1078
    %v1285 = vunpack.c.h.b16 %v1078
    %v1286 = vunpack.c.l.b16 %v1079
    %v1287 = vunpack.c.h.b16 %v1079
    %v1288 = vunpack.c.l.b16 %v1080
    %v1289 = vunpack.c.h.b16 %v1080
    %v1290 = vunpack.c.l.b16 %v1081
    %v1291 = vunpack.c.h.b16 %v1081
    %v1292 = vunpack.c.l.b16 %v1082
    %v1293 = vunpack.c.h.b16 %v1082
    %v1294 = vunpack.c.l.b16 %v1083
    %v1295 = vunpack.c.h.b16 %v1083
    %v1296 = vunpack.c.l.b16 %v1084
    %v1297 = vunpack.c.h.b16 %v1084
    %v1298 = vunpack.c.l.b16 %v1085
    %v1299 = vunpack.c.h.b16 %v1085
    %v1300 = vunpack.c.l.b16 %v1086
    %v1301 = vunpack.c.h.b16 %v1086
    %v1302 = vunpack.c.l.b16 %v1087
    %v1303 = vunpack.c.h.b16 %v1087
    %v1304 = vunpack.c.l.b16 %v1088
    %v1305 = vunpack.c.h.b16 %v1088
    %v1306 = vunpack.c.l.b16 %v1089
    %v1307 = vunpack.c.h.b16 %v1089
    %v1308 = vunpack.c.l.b16 %v1090
    %v1309 = vunpack.c.h.b16 %v1090
    %v1310 = vunpack.c.l.b16 %v1091
    %v1311 = vunpack.c.h.b16 %v1091
    %v1312 = vunpack.c.l.b16 %v1092
    %v1313 = vunpack.c.h.b16 %v1092
    %v1314 = vpack.c.b16 %v1188, %v1186
    %v1315 = vpack.c.b16 %v1189, %v1187
    %v1316 = vpack.c.b16 %v1192, %v1190
    %v1317 = vpack.c.b16 %v1193, %v1191
    %v1318 = vpack.c.b16 %v1196, %v1194
    %v1319 = vpack.c.b16 %v1197, %v1195
    %v1320 = vpack.c.b16 %v1200, %v1198
    %v1321 = vpack.c.b16 %v1201, %v1199
    %v1322 = vpack.c.b16 %v1204, %v1202
    %v1323 = vpack.c.b16 %v1205, %v1203
    %v1324 = vpack.c.b16 %v1208, %v1206
    %v1325 = vpack.c.b16 %v1209, %v1207
    %v1326 = vpack.c.b16 %v1212, %v1210
    %v1327 = vpack.c.b16 %v1213, %v1211
    %v1328 = vpack.c.b16 %v1216, %v1214
    %v1329 = vpack.c.b16 %v1217, %v1215
    %v1330 = vpack.c.b16 %v1220, %v1218
    %v1331 = vpack.c.b16 %v1221, %v1219
    %v1332 = vpack.c.b16 %v1224, %v1222
    %v1333 = vpack.c.b16 %v1225, %v1223
    %v1334 = vpack.c.b16 %v1228, %v1226
    %v1335 = vpack.c.b16 %v1229, %v1227
    %v1336 = vpack.c.b16 %v1232, %v1230
    %v1337 = vpack.c.b16 %v1233, %v1231
    %v1338 = vpack.c.b16 %v1236, %v1234
    %v1339 = vpack.c.b16 %v1237, %v1235
    %v1340 = vpack.c.b16 %v1240, %v1238
    %v1341 = vpack.c.b16 %v1241, %v1239
    %v1342 = vpack.c.b16 %v1244, %v1242
    %v1343 = vpack.c.b16 %v1245, %v1243
    %v1344 = vpack.c.b16 %v1248, %v1246
    %v1345 = vpack.c.b16 %v1249, %v1247
    %v1346 = vpack.c.b16 %v1252, %v1250
    %v1347 = vpack.c.b16 %v1253, %v1251
    %v1348 = vpack.c.b16 %v1256, %v1254
    %v1349 = vpack.c.b16 %v1257, %v1255
    %v1350 = vpack.c.b16 %v1260, %v1258
    %v1351 = vpack.c.b16 %v1261, %v1259
    %v1352 = vpack.c.b16 %v1264, %v1262
    %v1353 = vpack.c.b16 %v1265, %v1263
    %v1354 = vpack.c.b16 %v1268, %v1266
    %v1355 = vpack.c.b16 %v1269, %v1267
    %v1356 = vpack.c.b16 %v1272, %v1270
    %v1357 = vpack.c.b16 %v1273, %v1271
    %v1358 = vpack.c.b16 %v1276, %v1274
    %v1359 = vpack.c.b16 %v1277, %v1275
    %v1360 = vpack.c.b16 %v1280, %v1278
    %v1361 = vpack.c.b16 %v1281, %v1279
    %v1362 = vpack.c.b16 %v1284, %v1282
    %v1363 = vpack.c.b16 %v1285, %v1283
    %v1364 = vpack.c.b16 %v1288, %v1286
    %v1365 = vpack.c.b16 %v1289, %v1287
    %v1366 = vpack.c.b16 %v1292, %v1290
    %v1367 = vpack.c.b16 %v1293, %v1291
    %v1368 = vpack.c.b16 %v1296, %v1294
    %v1369 = vpack.c.b16 %v1297, %v1295
    %v1370 = vpack.c.b16 %v1300, %v1298
    %v1371 = vpack.c.b16 %v1301, %v1299
    %v1372 = vpack.c.b16 %v1304, %v1302
    %v1373 = vpack.c.b16 %v1305, %v1303
    %v1374 = vpack.c.b16 %v1308, %v1306
    %v1375 = vpack.c.b16 %v1309, %v1307
    %v1376 = vpack.c.b16 %v1312, %v1310
    %v1377 = vpack.c.b16 %v1313, %v1311
    %1442 = vmatprep.subr.bf16.mxu0 %v1315
    %1443 = vmatpush1.bf16.msra.mxu0 %v1314
    %1444 = vmatprep.subr.bf16.mxu0 %v1317
    %1445 = vmatpush1.bf16.msra.mxu0 %v1316
    %1446 = vmatprep.subr.bf16.mxu0 %v1319
    %1447 = vmatpush1.bf16.msra.mxu0 %v1318
    %1448 = vmatprep.subr.bf16.mxu0 %v1321
    %1449 = vmatpush1.bf16.msra.mxu0 %v1320
    %1450 = vmatprep.subr.bf16.mxu0 %v1323
    %1451 = vmatpush1.bf16.msra.mxu0 %v1322
    %1452 = vmatprep.subr.bf16.mxu0 %v1325
    %1453 = vmatpush1.bf16.msra.mxu0 %v1324
    %1454 = vmatprep.subr.bf16.mxu0 %v1327
    %1455 = vmatpush1.bf16.msra.mxu0 %v1326
    %1456 = vmatprep.subr.bf16.mxu0 %v1329
    %1457 = vmatpush1.bf16.msra.mxu0 %v1328
    %1458 = vmatprep.subr.bf16.mxu0 %v1331
    %1459 = vmatpush1.bf16.msra.mxu0 %v1330
    %1460 = vmatprep.subr.bf16.mxu0 %v1333
    %1461 = vmatpush1.bf16.msra.mxu0 %v1332
    %1462 = vmatprep.subr.bf16.mxu0 %v1335
    %1463 = vmatpush1.bf16.msra.mxu0 %v1334
    %1464 = vmatprep.subr.bf16.mxu0 %v1337
    %1465 = vmatpush1.bf16.msra.mxu0 %v1336
    %1466 = vmatprep.subr.bf16.mxu0 %v1339
    %1467 = vmatpush1.bf16.msra.mxu0 %v1338
    %1468 = vmatprep.subr.bf16.mxu0 %v1341
    %1469 = vmatpush1.bf16.msra.mxu0 %v1340
    %1470 = vmatprep.subr.bf16.mxu0 %v1343
    %1471 = vmatpush1.bf16.msra.mxu0 %v1342
    %1472 = vmatprep.subr.bf16.mxu0 %v1345
    %1473 = vmatpush1.bf16.msra.mxu0 %v1344
    %1474 = vmatprep.mubr.bf16.mxu0 %v1115
    %1475 = vmatmul.mubr.bf16.gmra.mrb[0].mxu0 %v1114
    %v1476 = vpop.f32.mrb[0].mxu0
    %v1477 = vadd.f32 0.0, %v1476
    %v1478 = vpop.f32.mrb[0].mxu0
    %v1479 = vadd.f32 0.0, %v1478
    %v1480 = vpop.f32.mrb[0].mxu0
    %v1481 = vpop.f32.mrb[0].mxu0
    %1482 = vdwg.mxu0
    %1483 = vmatprep.subr.bf16.mxu0 %v1347
    %1484 = vmatpush1.bf16.msra.mxu0 %v1346
    %1485 = vmatprep.subr.bf16.mxu0 %v1349
    %1486 = vmatpush1.bf16.msra.mxu0 %v1348
    %1487 = vmatprep.subr.bf16.mxu0 %v1351
    %1488 = vmatpush1.bf16.msra.mxu0 %v1350
    %1489 = vmatprep.subr.bf16.mxu0 %v1353
    %1490 = vmatpush1.bf16.msra.mxu0 %v1352
    %1491 = vmatprep.subr.bf16.mxu0 %v1355
    %1492 = vmatpush1.bf16.msra.mxu0 %v1354
    %1493 = vmatprep.subr.bf16.mxu0 %v1357
    %1494 = vmatpush1.bf16.msra.mxu0 %v1356
    %1495 = vmatprep.subr.bf16.mxu0 %v1359
    %1496 = vmatpush1.bf16.msra.mxu0 %v1358
    %1497 = vmatprep.subr.bf16.mxu0 %v1361
    %1498 = vmatpush1.bf16.msra.mxu0 %v1360
    %1499 = vmatprep.subr.bf16.mxu0 %v1363
    %1500 = vmatpush1.bf16.msra.mxu0 %v1362
    %1501 = vmatprep.subr.bf16.mxu0 %v1365
    %1502 = vmatpush1.bf16.msra.mxu0 %v1364
    %1503 = vmatprep.subr.bf16.mxu0 %v1367
    %1504 = vmatpush1.bf16.msra.mxu0 %v1366
    %1505 = vmatprep.subr.bf16.mxu0 %v1369
    %1506 = vmatpush1.bf16.msra.mxu0 %v1368
    %1507 = vmatprep.subr.bf16.mxu0 %v1371
    %1508 = vmatpush1.bf16.msra.mxu0 %v1370
    %1509 = vmatprep.subr.bf16.mxu0 %v1373
    %1510 = vmatpush1.bf16.msra.mxu0 %v1372
    %1511 = vmatprep.subr.bf16.mxu0 %v1375
    %1512 = vmatpush1.bf16.msra.mxu0 %v1374
    %1513 = vmatprep.subr.bf16.mxu0 %v1377
    %1514 = vmatpush1.bf16.msra.mxu0 %v1376
    %1515 = vmatprep.mubr.bf16.mxu0 %v1117
    %1516 = vmatmul.mubr.bf16.gmra.mrb[0].mxu0 %v1116
    %v1517 = vpop.f32.mrb[0].mxu0
    %v1518 = vadd.f32 %v1477, %v1517
    %v1519 = vpop.f32.mrb[0].mxu0
    %v1520 = vadd.f32 %v1479, %v1519
    %v1521 = vpop.f32.mrb[0].mxu0
    %v1522 = vpop.f32.mrb[0].mxu0
    %1523 = vdwg.mxu0
    %s1524 = scalar_lea.vmem [#allocation2], 32
    %v1525 = vld [vmem:[%s1524] ss:$8 sm:$0x3]
    %s1526 = scalar_lea.vmem [#allocation2], 33
    %v1527 = vld [vmem:[%s1526] ss:$8 sm:$0x3]
    %v1528 = vsel %vm186, %v1518, 0.0
    %v1529 = vrot.slane %v1528, 4
    %v1530 = vadd.f32 %v1528, %v1529
    %v1531 = vrot.slane %v1530, 2
    %v1532 = vadd.f32 %v1530, %v1531
    %v1533 = vrot.slane %v1532, 1
    %v1534 = vadd.f32 %v1532, %v1533
    %v1535 = vsel %vm186, %v1520, 0.0
    %v1536 = vrot.slane %v1535, 4
    %v1537 = vadd.f32 %v1535, %v1536
    %v1538 = vrot.slane %v1537, 2
    %v1539 = vadd.f32 %v1537, %v1538
    %v1540 = vrot.slane %v1539, 1
    %v1541 = vadd.f32 %v1539, %v1540
    %v1542 = vrcp.pop 2.0
    %v1543 = vmul.f32 %v1534, %v1542
    %v1544 = vmul.f32 %v1541, %v1542
    %v1545 = vmul.f32 %v1518, %v1518
    %v1546 = vmul.f32 %v1520, %v1520
    %v1547 = vsel %vm186, %v1545, 0.0
    %v1548 = vrot.slane %v1547, 4
    %v1549 = vadd.f32 %v1547, %v1548
    %v1550 = vrot.slane %v1549, 2
    %v1551 = vadd.f32 %v1549, %v1550
    %v1552 = vrot.slane %v1551, 1
    %v1553 = vadd.f32 %v1551, %v1552
    %v1554 = vsel %vm186, %v1546, 0.0
    %v1555 = vrot.slane %v1554, 4
    %v1556 = vadd.f32 %v1554, %v1555
    %v1557 = vrot.slane %v1556, 2
    %v1558 = vadd.f32 %v1556, %v1557
    %v1559 = vrot.slane %v1558, 1
    %v1560 = vadd.f32 %v1558, %v1559
    %v1561 = vmul.f32 %v1553, %v1542
    %v1562 = vmul.f32 %v1560, %v1542
    %v1563 = vmul.f32 %v1543, %v1543
    %v1564 = vmul.f32 %v1544, %v1544
    %v1565 = vsub.f32 %v1561, %v1563
    %v1566 = vsub.f32 %v1562, %v1564
    %v1567 = vmax.f32 %v1565, 0.0
    %v1568 = vmax.f32 %v1566, 0.0
    %v1569 = vsub.f32 %v1518, %v1543
    %v1570 = vsub.f32 %v1520, %v1544
    %v1571 = vadd.f32 %v1567, 1e-05
    %v1572 = vadd.f32 %v1568, 1e-05
    %v1573 = vrsqrt.pop %v1571
    %v1574 = vrsqrt.pop %v1572
    %v1575 = vmul.f32 %v1569, %v1573
    %v1576 = vmul.f32 %v1570, %v1574
    %v1578 = vlaneseq
    %v1579 = vshrl.u32 %v1578, 7
    %v1580 = vsub.s32 0, %v1579
    %v1581 = vrot.slane %v1525, %v1580
    %v1582 = vlaneseq
    %v1583 = vshrl.u32 %v1582, 7
    %v1584 = vsub.s32 1, %v1583
    %v1585 = vrot.slane %v1525, %v1584
    %v1588 = vmul.f32 %v1575, %v1581
    %v1589 = vmul.f32 %v1576, %v1585
    %v1591 = vlaneseq
    %v1592 = vshrl.u32 %v1591, 7
    %v1593 = vsub.s32 0, %v1592
    %v1594 = vrot.slane %v1527, %v1593
    %v1595 = vlaneseq
    %v1596 = vshrl.u32 %v1595, 7
    %v1597 = vsub.s32 1, %v1596
    %v1598 = vrot.slane %v1527, %v1597
    %v1601 = vadd.f32 %v1588, %v1594
    %v1602 = vadd.f32 %v1589, %v1598
    %v1603 = vmax.f32 %v1601, 0.0
    %v1604 = vmax.f32 %v1602, 0.0
    %v1605 = vpack.c.bf16 %v1603, %v1603
    %v1606 = vpack.c.bf16 %v1604, %v1604
    %v1607 = vld [vmem:[#allocation8] sm:$0xff]
    %v1608 = vld [vmem:[#allocation8 + $0x8] sm:$0xff]
    %v1609 = vld [vmem:[#allocation8 + $0x10] sm:$0xff]
    %v1610 = vld [vmem:[#allocation8 + $0x18] sm:$0xff]
    %v1611 = vld [vmem:[#allocation8 + $0x20] sm:$0xff]
    %v1612 = vld [vmem:[#allocation8 + $0x28] sm:$0xff]
    %v1613 = vld [vmem:[#allocation8 + $0x30] sm:$0xff]
    %v1614 = vld [vmem:[#allocation8 + $0x38] sm:$0xff]
    %v1615 = vld [vmem:[#allocation8 + $0x40] sm:$0xff]
    %v1616 = vld [vmem:[#allocation8 + $0x48] sm:$0xff]
    %v1617 = vld [vmem:[#allocation8 + $0x50] sm:$0xff]
    %v1618 = vld [vmem:[#allocation8 + $0x58] sm:$0xff]
    %v1619 = vld [vmem:[#allocation8 + $0x60] sm:$0xff]
    %v1620 = vld [vmem:[#allocation8 + $0x68] sm:$0xff]
    %v1621 = vld [vmem:[#allocation8 + $0x70] sm:$0xff]
    %v1622 = vld [vmem:[#allocation8 + $0x78] sm:$0xff]
    %v1623 = vld [vmem:[#allocation8 + $0x80] sm:$0xff]
    %v1624 = vld [vmem:[#allocation8 + $0x88] sm:$0xff]
    %v1625 = vld [vmem:[#allocation8 + $0x90] sm:$0xff]
    %v1626 = vld [vmem:[#allocation8 + $0x98] sm:$0xff]
    %v1627 = vld [vmem:[#allocation8 + $0xa0] sm:$0xff]
    %v1628 = vld [vmem:[#allocation8 + $0xa8] sm:$0xff]
    %v1629 = vld [vmem:[#allocation8 + $0xb0] sm:$0xff]
    %v1630 = vld [vmem:[#allocation8 + $0xb8] sm:$0xff]
    %v1631 = vld [vmem:[#allocation8 + $0xc0] sm:$0xff]
    %v1632 = vld [vmem:[#allocation8 + $0xc8] sm:$0xff]
    %v1633 = vld [vmem:[#allocation8 + $0xd0] sm:$0xff]
    %v1634 = vld [vmem:[#allocation8 + $0xd8] sm:$0xff]
    %v1635 = vld [vmem:[#allocation8 + $0xe0] sm:$0xff]
    %v1636 = vld [vmem:[#allocation8 + $0xe8] sm:$0xff]
    %v1637 = vld [vmem:[#allocation8 + $0xf0] sm:$0xff]
    %v1638 = vld [vmem:[#allocation8 + $0xf8] sm:$0xff]
    %v1671 = vunpack.c.l.b16 %v1607
    %v1672 = vunpack.c.h.b16 %v1607
    %v1673 = vunpack.c.l.b16 %v1608
    %v1674 = vunpack.c.h.b16 %v1608
    %v1675 = vunpack.c.l.b16 %v1609
    %v1676 = vunpack.c.h.b16 %v1609
    %v1677 = vunpack.c.l.b16 %v1610
    %v1678 = vunpack.c.h.b16 %v1610
    %v1679 = vunpack.c.l.b16 %v1611
    %v1680 = vunpack.c.h.b16 %v1611
    %v1681 = vunpack.c.l.b16 %v1612
    %v1682 = vunpack.c.h.b16 %v1612
    %v1683 = vunpack.c.l.b16 %v1613
    %v1684 = vunpack.c.h.b16 %v1613
    %v1685 = vunpack.c.l.b16 %v1614
    %v1686 = vunpack.c.h.b16 %v1614
    %v1687 = vunpack.c.l.b16 %v1615
    %v1688 = vunpack.c.h.b16 %v1615
    %v1689 = vunpack.c.l.b16 %v1616
    %v1690 = vunpack.c.h.b16 %v1616
    %v1691 = vunpack.c.l.b16 %v1617
    %v1692 = vunpack.c.h.b16 %v1617
    %v1693 = vunpack.c.l.b16 %v1618
    %v1694 = vunpack.c.h.b16 %v1618
    %v1695 = vunpack.c.l.b16 %v1619
    %v1696 = vunpack.c.h.b16 %v1619
    %v1697 = vunpack.c.l.b16 %v1620
    %v1698 = vunpack.c.h.b16 %v1620
    %v1699 = vunpack.c.l.b16 %v1621
    %v1700 = vunpack.c.h.b16 %v1621
    %v1701 = vunpack.c.l.b16 %v1622
    %v1702 = vunpack.c.h.b16 %v1622
    %v1703 = vunpack.c.l.b16 %v1623
    %v1704 = vunpack.c.h.b16 %v1623
    %v1705 = vunpack.c.l.b16 %v1624
    %v1706 = vunpack.c.h.b16 %v1624
    %v1707 = vunpack.c.l.b16 %v1625
    %v1708 = vunpack.c.h.b16 %v1625
    %v1709 = vunpack.c.l.b16 %v1626
    %v1710 = vunpack.c.h.b16 %v1626
    %v1711 = vunpack.c.l.b16 %v1627
    %v1712 = vunpack.c.h.b16 %v1627
    %v1713 = vunpack.c.l.b16 %v1628
    %v1714 = vunpack.c.h.b16 %v1628
    %v1715 = vunpack.c.l.b16 %v1629
    %v1716 = vunpack.c.h.b16 %v1629
    %v1717 = vunpack.c.l.b16 %v1630
    %v1718 = vunpack.c.h.b16 %v1630
    %v1719 = vunpack.c.l.b16 %v1631
    %v1720 = vunpack.c.h.b16 %v1631
    %v1721 = vunpack.c.l.b16 %v1632
    %v1722 = vunpack.c.h.b16 %v1632
    %v1723 = vunpack.c.l.b16 %v1633
    %v1724 = vunpack.c.h.b16 %v1633
    %v1725 = vunpack.c.l.b16 %v1634
    %v1726 = vunpack.c.h.b16 %v1634
    %v1727 = vunpack.c.l.b16 %v1635
    %v1728 = vunpack.c.h.b16 %v1635
    %v1729 = vunpack.c.l.b16 %v1636
    %v1730 = vunpack.c.h.b16 %v1636
    %v1731 = vunpack.c.l.b16 %v1637
    %v1732 = vunpack.c.h.b16 %v1637
    %v1733 = vunpack.c.l.b16 %v1638
    %v1734 = vunpack.c.h.b16 %v1638
    %v1735 = vpack.c.b16 %v1673, %v1671
    %v1736 = vpack.c.b16 %v1674, %v1672
    %v1737 = vpack.c.b16 %v1677, %v1675
    %v1738 = vpack.c.b16 %v1678, %v1676
    %v1739 = vpack.c.b16 %v1681, %v1679
    %v1740 = vpack.c.b16 %v1682, %v1680
    %v1741 = vpack.c.b16 %v1685, %v1683
    %v1742 = vpack.c.b16 %v1686, %v1684
    %v1743 = vpack.c.b16 %v1689, %v1687
    %v1744 = vpack.c.b16 %v1690, %v1688
    %v1745 = vpack.c.b16 %v1693, %v1691
    %v1746 = vpack.c.b16 %v1694, %v1692
    %v1747 = vpack.c.b16 %v1697, %v1695
    %v1748 = vpack.c.b16 %v1698, %v1696
    %v1749 = vpack.c.b16 %v1701, %v1699
    %v1750 = vpack.c.b16 %v1702, %v1700
    %v1751 = vpack.c.b16 %v1705, %v1703
    %v1752 = vpack.c.b16 %v1706, %v1704
    %v1753 = vpack.c.b16 %v1709, %v1707
    %v1754 = vpack.c.b16 %v1710, %v1708
    %v1755 = vpack.c.b16 %v1713, %v1711
    %v1756 = vpack.c.b16 %v1714, %v1712
    %v1757 = vpack.c.b16 %v1717, %v1715
    %v1758 = vpack.c.b16 %v1718, %v1716
    %v1759 = vpack.c.b16 %v1721, %v1719
    %v1760 = vpack.c.b16 %v1722, %v1720
    %v1761 = vpack.c.b16 %v1725, %v1723
    %v1762 = vpack.c.b16 %v1726, %v1724
    %v1763 = vpack.c.b16 %v1729, %v1727
    %v1764 = vpack.c.b16 %v1730, %v1728
    %v1765 = vpack.c.b16 %v1733, %v1731
    %v1766 = vpack.c.b16 %v1734, %v1732
    %1799 = vmatprep.subr.bf16.mxu0 %v1736
    %1800 = vmatpush1.bf16.msra.mxu0 %v1735
    %1801 = vmatprep.subr.bf16.mxu0 %v1738
    %1802 = vmatpush1.bf16.msra.mxu0 %v1737
    %1803 = vmatprep.subr.bf16.mxu0 %v1740
    %1804 = vmatpush1.bf16.msra.mxu0 %v1739
    %1805 = vmatprep.subr.bf16.mxu0 %v1742
    %1806 = vmatpush1.bf16.msra.mxu0 %v1741
    %1807 = vmatprep.subr.bf16.mxu0 %v1744
    %1808 = vmatpush1.bf16.msra.mxu0 %v1743
    %1809 = vmatprep.subr.bf16.mxu0 %v1746
    %1810 = vmatpush1.bf16.msra.mxu0 %v1745
    %1811 = vmatprep.subr.bf16.mxu0 %v1748
    %1812 = vmatpush1.bf16.msra.mxu0 %v1747
    %1813 = vmatprep.subr.bf16.mxu0 %v1750
    %1814 = vmatpush1.bf16.msra.mxu0 %v1749
    %1815 = vmatprep.subr.bf16.mxu0 %v1752
    %1816 = vmatpush1.bf16.msra.mxu0 %v1751
    %1817 = vmatprep.subr.bf16.mxu0 %v1754
    %1818 = vmatpush1.bf16.msra.mxu0 %v1753
    %1819 = vmatprep.subr.bf16.mxu0 %v1756
    %1820 = vmatpush1.bf16.msra.mxu0 %v1755
    %1821 = vmatprep.subr.bf16.mxu0 %v1758
    %1822 = vmatpush1.bf16.msra.mxu0 %v1757
    %1823 = vmatprep.subr.bf16.mxu0 %v1760
    %1824 = vmatpush1.bf16.msra.mxu0 %v1759
    %1825 = vmatprep.subr.bf16.mxu0 %v1762
    %1826 = vmatpush1.bf16.msra.mxu0 %v1761
    %1827 = vmatprep.subr.bf16.mxu0 %v1764
    %1828 = vmatpush1.bf16.msra.mxu0 %v1763
    %1829 = vmatprep.subr.bf16.mxu0 %v1766
    %1830 = vmatpush1.bf16.msra.mxu0 %v1765
    %1831 = vmatprep.mubr.bf16.mxu0 %v1606
    %1832 = vmatmul.mubr.bf16.gmra.mrb[0].mxu0 %v1605
    %v1833 = vpop.f32.mrb[0].mxu0
    %v1834 = vadd.f32 0.0, %v1833
    %v1835 = vpop.f32.mrb[0].mxu0
    %v1836 = vadd.f32 0.0, %v1835
    %v1837 = vpop.f32.mrb[0].mxu0
    %v1838 = vpop.f32.mrb[0].mxu0
    %1839 = vdwg.mxu0
    %s1840 = scalar_lea.vmem [#allocation2], 34
    %v1841 = vld [vmem:[%s1840] ss:$8 sm:$0x3]
    %s1842 = scalar_lea.vmem [#allocation2], 35
    %v1843 = vld [vmem:[%s1842] ss:$8 sm:$0x3]
    %v1844 = vsel %vm186, %v1834, 0.0
    %v1845 = vrot.slane %v1844, 4
    %v1846 = vadd.f32 %v1844, %v1845
    %v1847 = vrot.slane %v1846, 2
    %v1848 = vadd.f32 %v1846, %v1847
    %v1849 = vrot.slane %v1848, 1
    %v1850 = vadd.f32 %v1848, %v1849
    %v1851 = vsel %vm186, %v1836, 0.0
    %v1852 = vrot.slane %v1851, 4
    %v1853 = vadd.f32 %v1851, %v1852
    %v1854 = vrot.slane %v1853, 2
    %v1855 = vadd.f32 %v1853, %v1854
    %v1856 = vrot.slane %v1855, 1
    %v1857 = vadd.f32 %v1855, %v1856
    %v1858 = vmul.f32 %v1850, %v1542
    %v1859 = vmul.f32 %v1857, %v1542
    %v1860 = vmul.f32 %v1834, %v1834
    %v1861 = vmul.f32 %v1836, %v1836
    %v1862 = vsel %vm186, %v1860, 0.0
    %v1863 = vrot.slane %v1862, 4
    %v1864 = vadd.f32 %v1862, %v1863
    %v1865 = vrot.slane %v1864, 2
    %v1866 = vadd.f32 %v1864, %v1865
    %v1867 = vrot.slane %v1866, 1
    %v1868 = vadd.f32 %v1866, %v1867
    %v1869 = vsel %vm186, %v1861, 0.0
    %v1870 = vrot.slane %v1869, 4
    %v1871 = vadd.f32 %v1869, %v1870
    %v1872 = vrot.slane %v1871, 2
    %v1873 = vadd.f32 %v1871, %v1872
    %v1874 = vrot.slane %v1873, 1
    %v1875 = vadd.f32 %v1873, %v1874
    %v1876 = vmul.f32 %v1868, %v1542
    %v1877 = vmul.f32 %v1875, %v1542
    %v1878 = vmul.f32 %v1858, %v1858
    %v1879 = vmul.f32 %v1859, %v1859
    %v1880 = vsub.f32 %v1876, %v1878
    %v1881 = vsub.f32 %v1877, %v1879
    %v1882 = vmax.f32 %v1880, 0.0
    %v1883 = vmax.f32 %v1881, 0.0
    %v1884 = vsub.f32 %v1834, %v1858
    %v1885 = vsub.f32 %v1836, %v1859
    %v1886 = vadd.f32 %v1882, 1e-05
    %v1887 = vadd.f32 %v1883, 1e-05
    %v1888 = vrsqrt.pop %v1886
    %v1889 = vrsqrt.pop %v1887
    %v1890 = vmul.f32 %v1884, %v1888
    %v1891 = vmul.f32 %v1885, %v1889
    %v1893 = vlaneseq
    %v1894 = vshrl.u32 %v1893, 7
    %v1895 = vsub.s32 0, %v1894
    %v1896 = vrot.slane %v1841, %v1895
    %v1897 = vlaneseq
    %v1898 = vshrl.u32 %v1897, 7
    %v1899 = vsub.s32 1, %v1898
    %v1900 = vrot.slane %v1841, %v1899
    %v1903 = vmul.f32 %v1890, %v1896
    %v1904 = vmul.f32 %v1891, %v1900
    %v1906 = vlaneseq
    %v1907 = vshrl.u32 %v1906, 7
    %v1908 = vsub.s32 0, %v1907
    %v1909 = vrot.slane %v1843, %v1908
    %v1910 = vlaneseq
    %v1911 = vshrl.u32 %v1910, 7
    %v1912 = vsub.s32 1, %v1911
    %v1913 = vrot.slane %v1843, %v1912
    %v1916 = vadd.f32 %v1903, %v1909
    %v1917 = vadd.f32 %v1904, %v1913
    %v1918 = vmax.f32 %v1916, 0.0
    %v1919 = vmax.f32 %v1917, 0.0
    %v1920 = vpack.c.bf16 %v1918, %v1918
    %v1921 = vpack.c.bf16 %v1919, %v1919
    %v1922 = vld [vmem:[#allocation10] sm:$0xff]
    %v1923 = vld [vmem:[#allocation10 + $0x8] sm:$0xff]
    %v1924 = vld [vmem:[#allocation10 + $0x10] sm:$0xff]
    %v1925 = vld [vmem:[#allocation10 + $0x18] sm:$0xff]
    %v1926 = vld [vmem:[#allocation10 + $0x20] sm:$0xff]
    %v1927 = vld [vmem:[#allocation10 + $0x28] sm:$0xff]
    %v1928 = vld [vmem:[#allocation10 + $0x30] sm:$0xff]
    %v1929 = vld [vmem:[#allocation10 + $0x38] sm:$0xff]
    %v1930 = vld [vmem:[#allocation10 + $0x40] sm:$0xff]
    %v1931 = vld [vmem:[#allocation10 + $0x48] sm:$0xff]
    %v1932 = vld [vmem:[#allocation10 + $0x50] sm:$0xff]
    %v1933 = vld [vmem:[#allocation10 + $0x58] sm:$0xff]
    %v1934 = vld [vmem:[#allocation10 + $0x60] sm:$0xff]
    %v1935 = vld [vmem:[#allocation10 + $0x68] sm:$0xff]
    %v1936 = vld [vmem:[#allocation10 + $0x70] sm:$0xff]
    %v1937 = vld [vmem:[#allocation10 + $0x78] sm:$0xff]
    %v1938 = vld [vmem:[#allocation10 + $0x80] sm:$0xff]
    %v1939 = vld [vmem:[#allocation10 + $0x88] sm:$0xff]
    %v1940 = vld [vmem:[#allocation10 + $0x90] sm:$0xff]
    %v1941 = vld [vmem:[#allocation10 + $0x98] sm:$0xff]
    %v1942 = vld [vmem:[#allocation10 + $0xa0] sm:$0xff]
    %v1943 = vld [vmem:[#allocation10 + $0xa8] sm:$0xff]
    %v1944 = vld [vmem:[#allocation10 + $0xb0] sm:$0xff]
    %v1945 = vld [vmem:[#allocation10 + $0xb8] sm:$0xff]
    %v1946 = vld [vmem:[#allocation10 + $0xc0] sm:$0xff]
    %v1947 = vld [vmem:[#allocation10 + $0xc8] sm:$0xff]
    %v1948 = vld [vmem:[#allocation10 + $0xd0] sm:$0xff]
    %v1949 = vld [vmem:[#allocation10 + $0xd8] sm:$0xff]
    %v1950 = vld [vmem:[#allocation10 + $0xe0] sm:$0xff]
    %v1951 = vld [vmem:[#allocation10 + $0xe8] sm:$0xff]
    %v1952 = vld [vmem:[#allocation10 + $0xf0] sm:$0xff]
    %v1953 = vld [vmem:[#allocation10 + $0xf8] sm:$0xff]
    %v1954 = vld [vmem:[#allocation10 + $0x100] sm:$0xff]
    %v1955 = vld [vmem:[#allocation10 + $0x108] sm:$0xff]
    %v1956 = vld [vmem:[#allocation10 + $0x110] sm:$0xff]
    %v1957 = vld [vmem:[#allocation10 + $0x118] sm:$0xff]
    %v1958 = vld [vmem:[#allocation10 + $0x120] sm:$0xff]
    %v1959 = vld [vmem:[#allocation10 + $0x128] sm:$0xff]
    %v1960 = vld [vmem:[#allocation10 + $0x130] sm:$0xff]
    %v1961 = vld [vmem:[#allocation10 + $0x138] sm:$0xff]
    %v1962 = vld [vmem:[#allocation10 + $0x140] sm:$0xff]
    %v1963 = vld [vmem:[#allocation10 + $0x148] sm:$0xff]
    %v1964 = vld [vmem:[#allocation10 + $0x150] sm:$0xff]
    %v1965 = vld [vmem:[#allocation10 + $0x158] sm:$0xff]
    %v1966 = vld [vmem:[#allocation10 + $0x160] sm:$0xff]
    %v1967 = vld [vmem:[#allocation10 + $0x168] sm:$0xff]
    %v1968 = vld [vmem:[#allocation10 + $0x170] sm:$0xff]
    %v1969 = vld [vmem:[#allocation10 + $0x178] sm:$0xff]
    %v1970 = vld [vmem:[#allocation10 + $0x180] sm:$0xff]
    %v1971 = vld [vmem:[#allocation10 + $0x188] sm:$0xff]
    %v1972 = vld [vmem:[#allocation10 + $0x190] sm:$0xff]
    %v1973 = vld [vmem:[#allocation10 + $0x198] sm:$0xff]
    %v1974 = vld [vmem:[#allocation10 + $0x1a0] sm:$0xff]
    %v1975 = vld [vmem:[#allocation10 + $0x1a8] sm:$0xff]
    %v1976 = vld [vmem:[#allocation10 + $0x1b0] sm:$0xff]
    %v1977 = vld [vmem:[#allocation10 + $0x1b8] sm:$0xff]
    %v1978 = vld [vmem:[#allocation10 + $0x1c0] sm:$0xff]
    %v1979 = vld [vmem:[#allocation10 + $0x1c8] sm:$0xff]
    %v1980 = vld [vmem:[#allocation10 + $0x1d0] sm:$0xff]
    %v1981 = vld [vmem:[#allocation10 + $0x1d8] sm:$0xff]
    %v1982 = vld [vmem:[#allocation10 + $0x1e0] sm:$0xff]
    %v1983 = vld [vmem:[#allocation10 + $0x1e8] sm:$0xff]
    %v1984 = vld [vmem:[#allocation10 + $0x1f0] sm:$0xff]
    %v1985 = vld [vmem:[#allocation10 + $0x1f8] sm:$0xff]
    %s1986 = scalar_lea.vmem [#allocation2], 36
    %v1987 = vld [vmem:[%s1986] ss:$8 sm:$0xf]
    %v1989 = vlaneseq
    %v1990 = vshrl.u32 %v1989, 7
    %v1991 = vsub.s32 0, %v1990
    %v1992 = vrot.slane %v1987, %v1991
    %v1993 = vlaneseq
    %v1994 = vshrl.u32 %v1993, 7
    %v1995 = vsub.s32 1, %v1994
    %v1996 = vrot.slane %v1987, %v1995
    %v1997 = vlaneseq
    %v1998 = vshrl.u32 %v1997, 7
    %v1999 = vsub.s32 2, %v1998
    %v2000 = vrot.slane %v1987, %v1999
    %v2001 = vlaneseq
    %v2002 = vshrl.u32 %v2001, 7
    %v2003 = vsub.s32 3, %v2002
    %v2004 = vrot.slane %v1987, %v2003
    %v2073 = vunpack.c.l.b16 %v1922
    %v2074 = vunpack.c.h.b16 %v1922
    %v2075 = vunpack.c.l.b16 %v1923
    %v2076 = vunpack.c.h.b16 %v1923
    %v2077 = vunpack.c.l.b16 %v1924
    %v2078 = vunpack.c.h.b16 %v1924
    %v2079 = vunpack.c.l.b16 %v1925
    %v2080 = vunpack.c.h.b16 %v1925
    %v2081 = vunpack.c.l.b16 %v1926
    %v2082 = vunpack.c.h.b16 %v1926
    %v2083 = vunpack.c.l.b16 %v1927
    %v2084 = vunpack.c.h.b16 %v1927
    %v2085 = vunpack.c.l.b16 %v1928
    %v2086 = vunpack.c.h.b16 %v1928
    %v2087 = vunpack.c.l.b16 %v1929
    %v2088 = vunpack.c.h.b16 %v1929
    %v2089 = vunpack.c.l.b16 %v1930
    %v2090 = vunpack.c.h.b16 %v1930
    %v2091 = vunpack.c.l.b16 %v1931
    %v2092 = vunpack.c.h.b16 %v1931
    %v2093 = vunpack.c.l.b16 %v1932
    %v2094 = vunpack.c.h.b16 %v1932
    %v2095 = vunpack.c.l.b16 %v1933
    %v2096 = vunpack.c.h.b16 %v1933
    %v2097 = vunpack.c.l.b16 %v1934
    %v2098 = vunpack.c.h.b16 %v1934
    %v2099 = vunpack.c.l.b16 %v1935
    %v2100 = vunpack.c.h.b16 %v1935
    %v2101 = vunpack.c.l.b16 %v1936
    %v2102 = vunpack.c.h.b16 %v1936
    %v2103 = vunpack.c.l.b16 %v1937
    %v2104 = vunpack.c.h.b16 %v1937
    %v2105 = vunpack.c.l.b16 %v1938
    %v2106 = vunpack.c.h.b16 %v1938
    %v2107 = vunpack.c.l.b16 %v1939
    %v2108 = vunpack.c.h.b16 %v1939
    %v2109 = vunpack.c.l.b16 %v1940
    %v2110 = vunpack.c.h.b16 %v1940
    %v2111 = vunpack.c.l.b16 %v1941
    %v2112 = vunpack.c.h.b16 %v1941
    %v2113 = vunpack.c.l.b16 %v1942
    %v2114 = vunpack.c.h.b16 %v1942
    %v2115 = vunpack.c.l.b16 %v1943
    %v2116 = vunpack.c.h.b16 %v1943
    %v2117 = vunpack.c.l.b16 %v1944
    %v2118 = vunpack.c.h.b16 %v1944
    %v2119 = vunpack.c.l.b16 %v1945
    %v2120 = vunpack.c.h.b16 %v1945
    %v2121 = vunpack.c.l.b16 %v1946
    %v2122 = vunpack.c.h.b16 %v1946
    %v2123 = vunpack.c.l.b16 %v1947
    %v2124 = vunpack.c.h.b16 %v1947
    %v2125 = vunpack.c.l.b16 %v1948
    %v2126 = vunpack.c.h.b16 %v1948
    %v2127 = vunpack.c.l.b16 %v1949
    %v2128 = vunpack.c.h.b16 %v1949
    %v2129 = vunpack.c.l.b16 %v1950
    %v2130 = vunpack.c.h.b16 %v1950
    %v2131 = vunpack.c.l.b16 %v1951
    %v2132 = vunpack.c.h.b16 %v1951
    %v2133 = vunpack.c.l.b16 %v1952
    %v2134 = vunpack.c.h.b16 %v1952
    %v2135 = vunpack.c.l.b16 %v1953
    %v2136 = vunpack.c.h.b16 %v1953
    %v2137 = vunpack.c.l.b16 %v1954
    %v2138 = vunpack.c.h.b16 %v1954
    %v2139 = vunpack.c.l.b16 %v1955
    %v2140 = vunpack.c.h.b16 %v1955
    %v2141 = vunpack.c.l.b16 %v1956
    %v2142 = vunpack.c.h.b16 %v1956
    %v2143 = vunpack.c.l.b16 %v1957
    %v2144 = vunpack.c.h.b16 %v1957
    %v2145 = vunpack.c.l.b16 %v1958
    %v2146 = vunpack.c.h.b16 %v1958
    %v2147 = vunpack.c.l.b16 %v1959
    %v2148 = vunpack.c.h.b16 %v1959
    %v2149 = vunpack.c.l.b16 %v1960
    %v2150 = vunpack.c.h.b16 %v1960
    %v2151 = vunpack.c.l.b16 %v1961
    %v2152 = vunpack.c.h.b16 %v1961
    %v2153 = vunpack.c.l.b16 %v1962
    %v2154 = vunpack.c.h.b16 %v1962
    %v2155 = vunpack.c.l.b16 %v1963
    %v2156 = vunpack.c.h.b16 %v1963
    %v2157 = vunpack.c.l.b16 %v1964
    %v2158 = vunpack.c.h.b16 %v1964
    %v2159 = vunpack.c.l.b16 %v1965
    %v2160 = vunpack.c.h.b16 %v1965
    %v2161 = vunpack.c.l.b16 %v1966
    %v2162 = vunpack.c.h.b16 %v1966
    %v2163 = vunpack.c.l.b16 %v1967
    %v2164 = vunpack.c.h.b16 %v1967
    %v2165 = vunpack.c.l.b16 %v1968
    %v2166 = vunpack.c.h.b16 %v1968
    %v2167 = vunpack.c.l.b16 %v1969
    %v2168 = vunpack.c.h.b16 %v1969
    %v2169 = vunpack.c.l.b16 %v1970
    %v2170 = vunpack.c.h.b16 %v1970
    %v2171 = vunpack.c.l.b16 %v1971
    %v2172 = vunpack.c.h.b16 %v1971
    %v2173 = vunpack.c.l.b16 %v1972
    %v2174 = vunpack.c.h.b16 %v1972
    %v2175 = vunpack.c.l.b16 %v1973
    %v2176 = vunpack.c.h.b16 %v1973
    %v2177 = vunpack.c.l.b16 %v1974
    %v2178 = vunpack.c.h.b16 %v1974
    %v2179 = vunpack.c.l.b16 %v1975
    %v2180 = vunpack.c.h.b16 %v1975
    %v2181 = vunpack.c.l.b16 %v1976
    %v2182 = vunpack.c.h.b16 %v1976
    %v2183 = vunpack.c.l.b16 %v1977
    %v2184 = vunpack.c.h.b16 %v1977
    %v2185 = vunpack.c.l.b16 %v1978
    %v2186 = vunpack.c.h.b16 %v1978
    %v2187 = vunpack.c.l.b16 %v1979
    %v2188 = vunpack.c.h.b16 %v1979
    %v2189 = vunpack.c.l.b16 %v1980
    %v2190 = vunpack.c.h.b16 %v1980
    %v2191 = vunpack.c.l.b16 %v1981
    %v2192 = vunpack.c.h.b16 %v1981
    %v2193 = vunpack.c.l.b16 %v1982
    %v2194 = vunpack.c.h.b16 %v1982
    %v2195 = vunpack.c.l.b16 %v1983
    %v2196 = vunpack.c.h.b16 %v1983
    %v2197 = vunpack.c.l.b16 %v1984
    %v2198 = vunpack.c.h.b16 %v1984
    %v2199 = vunpack.c.l.b16 %v1985
    %v2200 = vunpack.c.h.b16 %v1985
    %v2201 = vpack.c.b16 %v2077, %v2073
    %v2202 = vpack.c.b16 %v2078, %v2074
    %v2203 = vpack.c.b16 %v2079, %v2075
    %v2204 = vpack.c.b16 %v2080, %v2076
    %v2205 = vpack.c.b16 %v2085, %v2081
    %v2206 = vpack.c.b16 %v2086, %v2082
    %v2207 = vpack.c.b16 %v2087, %v2083
    %v2208 = vpack.c.b16 %v2088, %v2084
    %v2209 = vpack.c.b16 %v2093, %v2089
    %v2210 = vpack.c.b16 %v2094, %v2090
    %v2211 = vpack.c.b16 %v2095, %v2091
    %v2212 = vpack.c.b16 %v2096, %v2092
    %v2213 = vpack.c.b16 %v2101, %v2097
    %v2214 = vpack.c.b16 %v2102, %v2098
    %v2215 = vpack.c.b16 %v2103, %v2099
    %v2216 = vpack.c.b16 %v2104, %v2100
    %v2217 = vpack.c.b16 %v2109, %v2105
    %v2218 = vpack.c.b16 %v2110, %v2106
    %v2219 = vpack.c.b16 %v2111, %v2107
    %v2220 = vpack.c.b16 %v2112, %v2108
    %v2221 = vpack.c.b16 %v2117, %v2113
    %v2222 = vpack.c.b16 %v2118, %v2114
    %v2223 = vpack.c.b16 %v2119, %v2115
    %v2224 = vpack.c.b16 %v2120, %v2116
    %v2225 = vpack.c.b16 %v2125, %v2121
    %v2226 = vpack.c.b16 %v2126, %v2122
    %v2227 = vpack.c.b16 %v2127, %v2123
    %v2228 = vpack.c.b16 %v2128, %v2124
    %v2229 = vpack.c.b16 %v2133, %v2129
    %v2230 = vpack.c.b16 %v2134, %v2130
    %v2231 = vpack.c.b16 %v2135, %v2131
    %v2232 = vpack.c.b16 %v2136, %v2132
    %v2233 = vpack.c.b16 %v2141, %v2137
    %v2234 = vpack.c.b16 %v2142, %v2138
    %v2235 = vpack.c.b16 %v2143, %v2139
    %v2236 = vpack.c.b16 %v2144, %v2140
    %v2237 = vpack.c.b16 %v2149, %v2145
    %v2238 = vpack.c.b16 %v2150, %v2146
    %v2239 = vpack.c.b16 %v2151, %v2147
    %v2240 = vpack.c.b16 %v2152, %v2148
    %v2241 = vpack.c.b16 %v2157, %v2153
    %v2242 = vpack.c.b16 %v2158, %v2154
    %v2243 = vpack.c.b16 %v2159, %v2155
    %v2244 = vpack.c.b16 %v2160, %v2156
    %v2245 = vpack.c.b16 %v2165, %v2161
    %v2246 = vpack.c.b16 %v2166, %v2162
    %v2247 = vpack.c.b16 %v2167, %v2163
    %v2248 = vpack.c.b16 %v2168, %v2164
    %v2249 = vpack.c.b16 %v2173, %v2169
    %v2250 = vpack.c.b16 %v2174, %v2170
    %v2251 = vpack.c.b16 %v2175, %v2171
    %v2252 = vpack.c.b16 %v2176, %v2172
    %v2253 = vpack.c.b16 %v2181, %v2177
    %v2254 = vpack.c.b16 %v2182, %v2178
    %v2255 = vpack.c.b16 %v2183, %v2179
    %v2256 = vpack.c.b16 %v2184, %v2180
    %v2257 = vpack.c.b16 %v2189, %v2185
    %v2258 = vpack.c.b16 %v2190, %v2186
    %v2259 = vpack.c.b16 %v2191, %v2187
    %v2260 = vpack.c.b16 %v2192, %v2188
    %v2261 = vpack.c.b16 %v2197, %v2193
    %v2262 = vpack.c.b16 %v2198, %v2194
    %v2263 = vpack.c.b16 %v2199, %v2195
    %v2264 = vpack.c.b16 %v2200, %v2196
    %2329 = vmatprep.subr.bf16.mxu0 %v2202
    %2330 = vmatpush1.bf16.msra.mxu0 %v2201
    %2331 = vmatprep.subr.bf16.mxu0 %v2206
    %2332 = vmatpush1.bf16.msra.mxu0 %v2205
    %2333 = vmatprep.subr.bf16.mxu0 %v2210
    %2334 = vmatpush1.bf16.msra.mxu0 %v2209
    %2335 = vmatprep.subr.bf16.mxu0 %v2214
    %2336 = vmatpush1.bf16.msra.mxu0 %v2213
    %2337 = vmatprep.subr.bf16.mxu0 %v2218
    %2338 = vmatpush1.bf16.msra.mxu0 %v2217
    %2339 = vmatprep.subr.bf16.mxu0 %v2222
    %2340 = vmatpush1.bf16.msra.mxu0 %v2221
    %2341 = vmatprep.subr.bf16.mxu0 %v2226
    %2342 = vmatpush1.bf16.msra.mxu0 %v2225
    %2343 = vmatprep.subr.bf16.mxu0 %v2230
    %2344 = vmatpush1.bf16.msra.mxu0 %v2229
    %2345 = vmatprep.subr.bf16.mxu0 %v2234
    %2346 = vmatpush1.bf16.msra.mxu0 %v2233
    %2347 = vmatprep.subr.bf16.mxu0 %v2238
    %2348 = vmatpush1.bf16.msra.mxu0 %v2237
    %2349 = vmatprep.subr.bf16.mxu0 %v2242
    %2350 = vmatpush1.bf16.msra.mxu0 %v2241
    %2351 = vmatprep.subr.bf16.mxu0 %v2246
    %2352 = vmatpush1.bf16.msra.mxu0 %v2245
    %2353 = vmatprep.subr.bf16.mxu0 %v2250
    %2354 = vmatpush1.bf16.msra.mxu0 %v2249
    %2355 = vmatprep.subr.bf16.mxu0 %v2254
    %2356 = vmatpush1.bf16.msra.mxu0 %v2253
    %2357 = vmatprep.subr.bf16.mxu0 %v2258
    %2358 = vmatpush1.bf16.msra.mxu0 %v2257
    %2359 = vmatprep.subr.bf16.mxu0 %v2262
    %2360 = vmatpush1.bf16.msra.mxu0 %v2261
    %2361 = vmatprep.mubr.bf16.mxu0 %v1921
    %2362 = vmatmul.mubr.bf16.gmra.mrb[0].mxu0 %v1920
    %v2363 = vpop.f32.mrb[0].mxu0
    %v2364 = vadd.f32 %v1992, %v2363
    %v2365 = vpop.f32.mrb[0].mxu0
    %v2366 = vadd.f32 %v1996, %v2365
    %v2367 = vpop.f32.mrb[0].mxu0
    %v2368 = vpop.f32.mrb[0].mxu0
    %2369 = vdwg.mxu0
    %2370 = vmatprep.subr.bf16.mxu0 %v2204
    %2371 = vmatpush1.bf16.msra.mxu0 %v2203
    %2372 = vmatprep.subr.bf16.mxu0 %v2208
    %2373 = vmatpush1.bf16.msra.mxu0 %v2207
    %2374 = vmatprep.subr.bf16.mxu0 %v2212
    %2375 = vmatpush1.bf16.msra.mxu0 %v2211
    %2376 = vmatprep.subr.bf16.mxu0 %v2216
    %2377 = vmatpush1.bf16.msra.mxu0 %v2215
    %2378 = vmatprep.subr.bf16.mxu0 %v2220
    %2379 = vmatpush1.bf16.msra.mxu0 %v2219
    %2380 = vmatprep.subr.bf16.mxu0 %v2224
    %2381 = vmatpush1.bf16.msra.mxu0 %v2223
    %2382 = vmatprep.subr.bf16.mxu0 %v2228
    %2383 = vmatpush1.bf16.msra.mxu0 %v2227
    %2384 = vmatprep.subr.bf16.mxu0 %v2232
    %2385 = vmatpush1.bf16.msra.mxu0 %v2231
    %2386 = vmatprep.subr.bf16.mxu0 %v2236
    %2387 = vmatpush1.bf16.msra.mxu0 %v2235
    %2388 = vmatprep.subr.bf16.mxu0 %v2240
    %2389 = vmatpush1.bf16.msra.mxu0 %v2239
    %2390 = vmatprep.subr.bf16.mxu0 %v2244
    %2391 = vmatpush1.bf16.msra.mxu0 %v2243
    %2392 = vmatprep.subr.bf16.mxu0 %v2248
    %2393 = vmatpush1.bf16.msra.mxu0 %v2247
    %2394 = vmatprep.subr.bf16.mxu0 %v2252
    %2395 = vmatpush1.bf16.msra.mxu0 %v2251
    %2396 = vmatprep.subr.bf16.mxu0 %v2256
    %2397 = vmatpush1.bf16.msra.mxu0 %v2255
    %2398 = vmatprep.subr.bf16.mxu0 %v2260
    %2399 = vmatpush1.bf16.msra.mxu0 %v2259
    %2400 = vmatprep.subr.bf16.mxu0 %v2264
    %2401 = vmatpush1.bf16.msra.mxu0 %v2263
    %2402 = vmatprep.mubr.bf16.mxu0 %v1921
    %2403 = vmatmul.mubr.bf16.gmra.mrb[0].mxu0 %v1920
    %v2404 = vpop.f32.mrb[0].mxu0
    %v2405 = vadd.f32 %v2000, %v2404
    %v2406 = vpop.f32.mrb[0].mxu0
    %v2407 = vadd.f32 %v2004, %v2406
    %v2408 = vpop.f32.mrb[0].mxu0
    %v2409 = vpop.f32.mrb[0].mxu0
    %2410 = vdwg.mxu0
    %v2411 = vmax.f32 %v2364, 0.0
    %v2412 = vmax.f32 %v2366, 0.0
    %v2413 = vmax.f32 %v2405, 0.0
    %v2414 = vmax.f32 %v2407, 0.0
    %v2415 = vpack.c.bf16 %v2411, %v2411
    %v2416 = vpack.c.bf16 %v2412, %v2412
    %v2417 = vpack.c.bf16 %v2413, %v2413
    %v2418 = vpack.c.bf16 %v2414, %v2414
    %v2419 = vld [vmem:[#allocation11] sm:$0xf]
    %v2420 = vld [vmem:[#allocation11 + $0x4] sm:$0xf]
    %v2421 = vld [vmem:[#allocation11 + $0x8] sm:$0xf]
    %v2422 = vld [vmem:[#allocation11 + $0xc] sm:$0xf]
    %v2423 = vld [vmem:[#allocation11 + $0x10] sm:$0xf]
    %v2424 = vld [vmem:[#allocation11 + $0x14] sm:$0xf]
    %v2425 = vld [vmem:[#allocation11 + $0x18] sm:$0xf]
    %v2426 = vld [vmem:[#allocation11 + $0x1c] sm:$0xf]
    %v2427 = vld [vmem:[#allocation11 + $0x20] sm:$0xf]
    %v2428 = vld [vmem:[#allocation11 + $0x24] sm:$0xf]
    %v2429 = vld [vmem:[#allocation11 + $0x28] sm:$0xf]
    %v2430 = vld [vmem:[#allocation11 + $0x2c] sm:$0xf]
    %v2431 = vld [vmem:[#allocation11 + $0x30] sm:$0xf]
    %v2432 = vld [vmem:[#allocation11 + $0x34] sm:$0xf]
    %v2433 = vld [vmem:[#allocation11 + $0x38] sm:$0xf]
    %v2434 = vld [vmem:[#allocation11 + $0x3c] sm:$0xf]
    %v2435 = vld [vmem:[#allocation11 + $0x40] sm:$0xf]
    %v2436 = vld [vmem:[#allocation11 + $0x44] sm:$0xf]
    %v2437 = vld [vmem:[#allocation11 + $0x48] sm:$0xf]
    %v2438 = vld [vmem:[#allocation11 + $0x4c] sm:$0xf]
    %v2439 = vld [vmem:[#allocation11 + $0x50] sm:$0xf]
    %v2440 = vld [vmem:[#allocation11 + $0x54] sm:$0xf]
    %v2441 = vld [vmem:[#allocation11 + $0x58] sm:$0xf]
    %v2442 = vld [vmem:[#allocation11 + $0x5c] sm:$0xf]
    %v2443 = vld [vmem:[#allocation11 + $0x60] sm:$0xf]
    %v2444 = vld [vmem:[#allocation11 + $0x64] sm:$0xf]
    %v2445 = vld [vmem:[#allocation11 + $0x68] sm:$0xf]
    %v2446 = vld [vmem:[#allocation11 + $0x6c] sm:$0xf]
    %v2447 = vld [vmem:[#allocation11 + $0x70] sm:$0xf]
    %v2448 = vld [vmem:[#allocation11 + $0x74] sm:$0xf]
    %v2449 = vld [vmem:[#allocation11 + $0x78] sm:$0xf]
    %v2450 = vld [vmem:[#allocation11 + $0x7c] sm:$0xf]
    %v2451 = vld [vmem:[#allocation11 + $0x80] sm:$0xf]
    %v2452 = vld [vmem:[#allocation11 + $0x84] sm:$0xf]
    %v2453 = vld [vmem:[#allocation11 + $0x88] sm:$0xf]
    %v2454 = vld [vmem:[#allocation11 + $0x8c] sm:$0xf]
    %v2455 = vld [vmem:[#allocation11 + $0x90] sm:$0xf]
    %v2456 = vld [vmem:[#allocation11 + $0x94] sm:$0xf]
    %v2457 = vld [vmem:[#allocation11 + $0x98] sm:$0xf]
    %v2458 = vld [vmem:[#allocation11 + $0x9c] sm:$0xf]
    %v2459 = vld [vmem:[#allocation11 + $0xa0] sm:$0xf]
    %v2460 = vld [vmem:[#allocation11 + $0xa4] sm:$0xf]
    %v2461 = vld [vmem:[#allocation11 + $0xa8] sm:$0xf]
    %v2462 = vld [vmem:[#allocation11 + $0xac] sm:$0xf]
    %v2463 = vld [vmem:[#allocation11 + $0xb0] sm:$0xf]
    %v2464 = vld [vmem:[#allocation11 + $0xb4] sm:$0xf]
    %v2465 = vld [vmem:[#allocation11 + $0xb8] sm:$0xf]
    %v2466 = vld [vmem:[#allocation11 + $0xbc] sm:$0xf]
    %v2467 = vld [vmem:[#allocation11 + $0xc0] sm:$0xf]
    %v2468 = vld [vmem:[#allocation11 + $0xc4] sm:$0xf]
    %v2469 = vld [vmem:[#allocation11 + $0xc8] sm:$0xf]
    %v2470 = vld [vmem:[#allocation11 + $0xcc] sm:$0xf]
    %v2471 = vld [vmem:[#allocation11 + $0xd0] sm:$0xf]
    %v2472 = vld [vmem:[#allocation11 + $0xd4] sm:$0xf]
    %v2473 = vld [vmem:[#allocation11 + $0xd8] sm:$0xf]
    %v2474 = vld [vmem:[#allocation11 + $0xdc] sm:$0xf]
    %v2475 = vld [vmem:[#allocation11 + $0xe0] sm:$0xf]
    %v2476 = vld [vmem:[#allocation11 + $0xe4] sm:$0xf]
    %v2477 = vld [vmem:[#allocation11 + $0xe8] sm:$0xf]
    %v2478 = vld [vmem:[#allocation11 + $0xec] sm:$0xf]
    %v2479 = vld [vmem:[#allocation11 + $0xf0] sm:$0xf]
    %v2480 = vld [vmem:[#allocation11 + $0xf4] sm:$0xf]
    %v2481 = vld [vmem:[#allocation11 + $0xf8] sm:$0xf]
    %v2482 = vld [vmem:[#allocation11 + $0xfc] sm:$0xf]
    %v2547 = vunpack.c.l.b16 %v2419
    %v2548 = vunpack.c.l.b16 %v2420
    %v2549 = vunpack.c.l.b16 %v2421
    %v2550 = vunpack.c.l.b16 %v2422
    %v2551 = vunpack.c.l.b16 %v2423
    %v2552 = vunpack.c.l.b16 %v2424
    %v2553 = vunpack.c.l.b16 %v2425
    %v2554 = vunpack.c.l.b16 %v2426
    %v2555 = vunpack.c.l.b16 %v2427
    %v2556 = vunpack.c.l.b16 %v2428
    %v2557 = vunpack.c.l.b16 %v2429
    %v2558 = vunpack.c.l.b16 %v2430
    %v2559 = vunpack.c.l.b16 %v2431
    %v2560 = vunpack.c.l.b16 %v2432
    %v2561 = vunpack.c.l.b16 %v2433
    %v2562 = vunpack.c.l.b16 %v2434
    %v2563 = vunpack.c.l.b16 %v2435
    %v2564 = vunpack.c.l.b16 %v2436
    %v2565 = vunpack.c.l.b16 %v2437
    %v2566 = vunpack.c.l.b16 %v2438
    %v2567 = vunpack.c.l.b16 %v2439
    %v2568 = vunpack.c.l.b16 %v2440
    %v2569 = vunpack.c.l.b16 %v2441
    %v2570 = vunpack.c.l.b16 %v2442
    %v2571 = vunpack.c.l.b16 %v2443
    %v2572 = vunpack.c.l.b16 %v2444
    %v2573 = vunpack.c.l.b16 %v2445
    %v2574 = vunpack.c.l.b16 %v2446
    %v2575 = vunpack.c.l.b16 %v2447
    %v2576 = vunpack.c.l.b16 %v2448
    %v2577 = vunpack.c.l.b16 %v2449
    %v2578 = vunpack.c.l.b16 %v2450
    %v2579 = vunpack.c.l.b16 %v2451
    %v2580 = vunpack.c.l.b16 %v2452
    %v2581 = vunpack.c.l.b16 %v2453
    %v2582 = vunpack.c.l.b16 %v2454
    %v2583 = vunpack.c.l.b16 %v2455
    %v2584 = vunpack.c.l.b16 %v2456
    %v2585 = vunpack.c.l.b16 %v2457
    %v2586 = vunpack.c.l.b16 %v2458
    %v2587 = vunpack.c.l.b16 %v2459
    %v2588 = vunpack.c.l.b16 %v2460
    %v2589 = vunpack.c.l.b16 %v2461
    %v2590 = vunpack.c.l.b16 %v2462
    %v2591 = vunpack.c.l.b16 %v2463
    %v2592 = vunpack.c.l.b16 %v2464
    %v2593 = vunpack.c.l.b16 %v2465
    %v2594 = vunpack.c.l.b16 %v2466
    %v2595 = vunpack.c.l.b16 %v2467
    %v2596 = vunpack.c.l.b16 %v2468
    %v2597 = vunpack.c.l.b16 %v2469
    %v2598 = vunpack.c.l.b16 %v2470
    %v2599 = vunpack.c.l.b16 %v2471
    %v2600 = vunpack.c.l.b16 %v2472
    %v2601 = vunpack.c.l.b16 %v2473
    %v2602 = vunpack.c.l.b16 %v2474
    %v2603 = vunpack.c.l.b16 %v2475
    %v2604 = vunpack.c.l.b16 %v2476
    %v2605 = vunpack.c.l.b16 %v2477
    %v2606 = vunpack.c.l.b16 %v2478
    %v2607 = vunpack.c.l.b16 %v2479
    %v2608 = vunpack.c.l.b16 %v2480
    %v2609 = vunpack.c.l.b16 %v2481
    %v2610 = vunpack.c.l.b16 %v2482
    %v2611 = vpack.c.b16 %v2548, %v2547
    %v2612 = vpack.c.b16 %v2550, %v2549
    %v2613 = vpack.c.b16 %v2552, %v2551
    %v2614 = vpack.c.b16 %v2554, %v2553
    %v2615 = vpack.c.b16 %v2556, %v2555
    %v2616 = vpack.c.b16 %v2558, %v2557
    %v2617 = vpack.c.b16 %v2560, %v2559
    %v2618 = vpack.c.b16 %v2562, %v2561
    %v2619 = vpack.c.b16 %v2564, %v2563
    %v2620 = vpack.c.b16 %v2566, %v2565
    %v2621 = vpack.c.b16 %v2568, %v2567
    %v2622 = vpack.c.b16 %v2570, %v2569
    %v2623 = vpack.c.b16 %v2572, %v2571
    %v2624 = vpack.c.b16 %v2574, %v2573
    %v2625 = vpack.c.b16 %v2576, %v2575
    %v2626 = vpack.c.b16 %v2578, %v2577
    %v2627 = vpack.c.b16 %v2580, %v2579
    %v2628 = vpack.c.b16 %v2582, %v2581
    %v2629 = vpack.c.b16 %v2584, %v2583
    %v2630 = vpack.c.b16 %v2586, %v2585
    %v2631 = vpack.c.b16 %v2588, %v2587
    %v2632 = vpack.c.b16 %v2590, %v2589
    %v2633 = vpack.c.b16 %v2592, %v2591
    %v2634 = vpack.c.b16 %v2594, %v2593
    %v2635 = vpack.c.b16 %v2596, %v2595
    %v2636 = vpack.c.b16 %v2598, %v2597
    %v2637 = vpack.c.b16 %v2600, %v2599
    %v2638 = vpack.c.b16 %v2602, %v2601
    %v2639 = vpack.c.b16 %v2604, %v2603
    %v2640 = vpack.c.b16 %v2606, %v2605
    %v2641 = vpack.c.b16 %v2608, %v2607
    %v2642 = vpack.c.b16 %v2610, %v2609
    %2675 = vmatprep.subr.bf16.mxu0 0
    %2676 = vmatpush1.bf16.msra.mxu0 %v2611
    %2677 = vmatprep.subr.bf16.mxu0 0
    %2678 = vmatpush1.bf16.msra.mxu0 %v2612
    %2679 = vmatprep.subr.bf16.mxu0 0
    %2680 = vmatpush1.bf16.msra.mxu0 %v2613
    %2681 = vmatprep.subr.bf16.mxu0 0
    %2682 = vmatpush1.bf16.msra.mxu0 %v2614
    %2683 = vmatprep.subr.bf16.mxu0 0
    %2684 = vmatpush1.bf16.msra.mxu0 %v2615
    %2685 = vmatprep.subr.bf16.mxu0 0
    %2686 = vmatpush1.bf16.msra.mxu0 %v2616
    %2687 = vmatprep.subr.bf16.mxu0 0
    %2688 = vmatpush1.bf16.msra.mxu0 %v2617
    %2689 = vmatprep.subr.bf16.mxu0 0
    %2690 = vmatpush1.bf16.msra.mxu0 %v2618
    %2691 = vmatprep.subr.bf16.mxu0 0
    %2692 = vmatpush1.bf16.msra.mxu0 %v2619
    %2693 = vmatprep.subr.bf16.mxu0 0
    %2694 = vmatpush1.bf16.msra.mxu0 %v2620
    %2695 = vmatprep.subr.bf16.mxu0 0
    %2696 = vmatpush1.bf16.msra.mxu0 %v2621
    %2697 = vmatprep.subr.bf16.mxu0 0
    %2698 = vmatpush1.bf16.msra.mxu0 %v2622
    %2699 = vmatprep.subr.bf16.mxu0 0
    %2700 = vmatpush1.bf16.msra.mxu0 %v2623
    %2701 = vmatprep.subr.bf16.mxu0 0
    %2702 = vmatpush1.bf16.msra.mxu0 %v2624
    %2703 = vmatprep.subr.bf16.mxu0 0
    %2704 = vmatpush1.bf16.msra.mxu0 %v2625
    %2705 = vmatprep.subr.bf16.mxu0 0
    %2706 = vmatpush1.bf16.msra.mxu0 %v2626
    %2707 = vmatprep.mubr.bf16.mxu0 %v2416
    %2708 = vmatmul.mubr.bf16.gmra.mrb[0].mxu0 %v2415
    %v2709 = vpop.f32.mrb[0].mxu0
    %v2710 = vadd.f32 0.0, %v2709
    %v2711 = vpop.f32.mrb[0].mxu0
    %v2712 = vpop.f32.mrb[0].mxu0
    %v2713 = vpop.f32.mrb[0].mxu0
    %2714 = vdwg.mxu0
    %2715 = vmatprep.subr.bf16.mxu0 0
    %2716 = vmatpush1.bf16.msra.mxu0 %v2627
    %2717 = vmatprep.subr.bf16.mxu0 0
    %2718 = vmatpush1.bf16.msra.mxu0 %v2628
    %2719 = vmatprep.subr.bf16.mxu0 0
    %2720 = vmatpush1.bf16.msra.mxu0 %v2629
    %2721 = vmatprep.subr.bf16.mxu0 0
    %2722 = vmatpush1.bf16.msra.mxu0 %v2630
    %2723 = vmatprep.subr.bf16.mxu0 0
    %2724 = vmatpush1.bf16.msra.mxu0 %v2631
    %2725 = vmatprep.subr.bf16.mxu0 0
    %2726 = vmatpush1.bf16.msra.mxu0 %v2632
    %2727 = vmatprep.subr.bf16.mxu0 0
    %2728 = vmatpush1.bf16.msra.mxu0 %v2633
    %2729 = vmatprep.subr.bf16.mxu0 0
    %2730 = vmatpush1.bf16.msra.mxu0 %v2634
    %2731 = vmatprep.subr.bf16.mxu0 0
    %2732 = vmatpush1.bf16.msra.mxu0 %v2635
    %2733 = vmatprep.subr.bf16.mxu0 0
    %2734 = vmatpush1.bf16.msra.mxu0 %v2636
    %2735 = vmatprep.subr.bf16.mxu0 0
    %2736 = vmatpush1.bf16.msra.mxu0 %v2637
    %2737 = vmatprep.subr.bf16.mxu0 0
    %2738 = vmatpush1.bf16.msra.mxu0 %v2638
    %2739 = vmatprep.subr.bf16.mxu0 0
    %2740 = vmatpush1.bf16.msra.mxu0 %v2639
    %2741 = vmatprep.subr.bf16.mxu0 0
    %2742 = vmatpush1.bf16.msra.mxu0 %v2640
    %2743 = vmatprep.subr.bf16.mxu0 0
    %2744 = vmatpush1.bf16.msra.mxu0 %v2641
    %2745 = vmatprep.subr.bf16.mxu0 0
    %2746 = vmatpush1.bf16.msra.mxu0 %v2642
    %2747 = vmatprep.mubr.bf16.mxu0 %v2418
    %2748 = vmatmul.mubr.bf16.gmra.mrb[0].mxu0 %v2417
    %v2749 = vpop.f32.mrb[0].mxu0
    %v2750 = vadd.f32 %v2710, %v2749
    %v2751 = vpop.f32.mrb[0].mxu0
    %v2752 = vpop.f32.mrb[0].mxu0
    %v2753 = vpop.f32.mrb[0].mxu0
    %2754 = vdwg.mxu0
    %2755 = vst [vmem:[#allocation13] sm:$0x3] %v2750
    // Predicated region
    $region62: #{tpu_custom_call.1} parent=1 // pred_check
      _
    $region63: #{tpu_custom_call.1} parent=1 // pred_check_branch
      %2757 = sbr.rel (0) target = $region65
    $region64: #{tpu_custom_call.1} parent=1 // pred_region
      %s2759 = ssub.s32 32, 32
      %2760 = vsyncadd [#allocation4], %s2759
      %s2762 = sshll.u32 [#allocation13], 4
      %s2763 = int_to_ptr.vmem [resolvable:$true] %s2762
      %2765 = dma.vmem_to_hbm [thread:$0]  %s2763, 32, %s9, [#allocation4]
    $region65: #{tpu_custom_call.1} parent=1 // pred_fallthru
      _
    // Predicated region
    $region66: #{tpu_custom_call.1} parent=1 // pred_check
      _
    $region67: #{tpu_custom_call.1} parent=1 // pred_check_branch
      %2767 = sbr.rel (0) target = $region69
    $region68: #{tpu_custom_call.1} parent=1 // pred_region
      %2768 = dma.done [#allocation4], 32
    $region69: #{tpu_custom_call.1} parent=1 // pred_fallthru
      _
    %2769 = vsyncpa [#allocation3], 1
    %2770 = vsyncpa [#allocation6], 1
    %2771 = vsyncpa [#allocation9], 1
    %2772 = vsyncpa [#allocation12], 1
    %2773 = vsyncpa [#allocation4], 1

</llo_original>
